<compile_context>
chip_gen: v7x
topology: tpu7x:2x2x1
jax: 0.10.0
libtpu: 0.0.40
codegen_flags: <defaults>
</compile_context>

<pallas_src>
import functools
import math

import jax
import jax.numpy as jnp
from jax import lax
from jax.experimental import pallas as pl
from jax.experimental.pallas import tpu as pltpu

NEG_INF = -1e6
LN_EPS = 1e-5
LANE = 128


def _round_up(n, m):
    return ((n + m - 1) // m) * m


# ------------------------------ kernel ------------------------------
def _encoder_kernel(num_heads, d_pad, d_real, mm_dtype,
                    x_ref, adj_ref,
                    ln1_g_ref, ln1_b_ref,
                    w_qkv_ref, b_qkv_ref, wo_ref, bo_ref,
                    ln2_g_ref, ln2_b_ref,
                    w1_ref, b1_ref, w2_ref, b2_ref,
                    out_ref):
    H, Dp = num_heads, d_pad
    layer = pl.program_id(1)

    # out_ref is the layer-to-layer carry: its block index is constant over the
    # (sequential, "arbitrary") layer axis, so it stays resident in VMEM and is
    # flushed to HBM only once per graph, after the last layer.
    @pl.when(layer == 0)
    def _():
        out_ref[0] = x_ref[0]

    x = out_ref[0]            # [N, Dp] f32; padded feature columns stay exactly 0
    adj_mask = adj_ref[0] > 0.0   # [N, N] bool, hoisted out of the head loop

    # Feature-column mask so LayerNorm statistics run over the real D columns
    # only (padded columns of x are zero, so only the variance needs masking).
    col = lax.broadcasted_iota(jnp.int32, (1, Dp), 1)
    feat_mask = (col < d_real).astype(jnp.float32)
    inv_d = 1.0 / d_real

    def layer_norm(v, gamma, beta):
        mean = jnp.sum(v, axis=-1, keepdims=True) * inv_d
        diff = (v - mean) * feat_mask
        var = jnp.sum(diff * diff, axis=-1, keepdims=True) * inv_d
        return diff * lax.rsqrt(var + LN_EPS) * gamma + beta

    # ---- LayerNorm 1 ----
    h = layer_norm(x, ln1_g_ref[0], ln1_b_ref[0])

    # ---- Multi-head masked attention (ptr=None path) ----
    # All head Q/K/V projections fused into one wide, lane-dense matmul.
    # 1/sqrt(D) is already folded into the Q columns of w_qkv / b_qkv.
    qkv = jnp.dot(h, w_qkv_ref[0], preferred_element_type=jnp.float32) + b_qkv_ref[0]
    wo = wo_ref[0]            # [H*Dp, Dp]

    attn = None
    for hd in range(H):
        q = qkv[:, hd * Dp:(hd + 1) * Dp].astype(mm_dtype)
        k = qkv[:, (H + hd) * Dp:(H + hd + 1) * Dp].astype(mm_dtype)
        v = qkv[:, (2 * H + hd) * Dp:(2 * H + hd + 1) * Dp].astype(mm_dtype)

        a = lax.dot_general(q, k, (((1,), (1,)), ((), ())),
                            preferred_element_type=jnp.float32)
        # adj is exactly {0,1}: where(adj, a, NEG_INF) == a*adj + (1-adj)*NEG_INF
        a = jnp.where(adj_mask, a, NEG_INF)
        a = a - jnp.max(a, axis=-1, keepdims=True)
        p = jnp.exp(a)
        inv = pl.reciprocal(jnp.sum(p, axis=-1, keepdims=True), approx=True)

        o = jnp.dot(p.astype(mm_dtype), v, preferred_element_type=jnp.float32)
        o = o * inv           # normalize the [N, Dp] output, not the [N, N] probs

        # Accumulate this head's contribution through its 128-aligned row slice
        # of the output projection (no concatenate / cross-lane relayout).
        contrib = jnp.dot(o, wo[hd * Dp:(hd + 1) * Dp, :],
                          preferred_element_type=jnp.float32)
        attn = contrib if attn is None else attn + contrib
    attn = attn + bo_ref[0]

    x_prime = attn + x

    # ---- LayerNorm 2 + FFN ----
    h2 = layer_norm(x_prime, ln2_g_ref[0], ln2_b_ref[0])
    ff = jnp.maximum(
        jnp.dot(h2, w1_ref[0], preferred_element_type=jnp.float32) + b1_ref[0], 0.0)
    ff = jnp.dot(ff, w2_ref[0], preferred_element_type=jnp.float32) + b2_ref[0]

    out_ref[0] = ff + x_prime


# ------------------------- parameter fusing/padding -------------------------
_STACK_KEYS = ("ln1_g", "ln1_b", "w_qkv", "b_qkv", "wo", "bo",
               "ln2_g", "ln2_b", "w1", "b1", "w2", "b2")


def _pad2(a, rows, cols):
    return jnp.pad(a, ((0, rows - a.shape[0]), (0, cols - a.shape[1])))


def _pad_row(a, cols):
    return jnp.pad(a, (0, cols - a.shape[0])).reshape(1, cols)


def _fuse_and_pad_layer(p, d, num_heads, d_pad):
    """Fuse per-head Q/K/V weights into one wide matmul operand, fold the
    1/sqrt(D) score scale into the Q columns, and zero-pad every feature axis
    to a lane-dense multiple of 128 (pad gammas/betas/biases are zero so the
    padded feature columns stay exactly zero through every layer)."""
    scale = 1.0 / math.sqrt(d)
    heads = p["heads"]
    wq = [_pad2(h["wq"] * scale, d_pad, d_pad) for h in heads]
    wk = [_pad2(h["wk"], d_pad, d_pad) for h in heads]
    wv = [_pad2(h["wv"], d_pad, d_pad) for h in heads]
    bq = [jnp.pad(h["bq"] * scale, (0, d_pad - d)) for h in heads]
    bk = [jnp.pad(h["bk"], (0, d_pad - d)) for h in heads]
    bv = [jnp.pad(h["bv"], (0, d_pad - d)) for h in heads]
    w_qkv = jnp.concatenate(wq + wk + wv, axis=1)             # [Dp, 3*H*Dp]
    b_qkv = jnp.concatenate(bq + bk + bv).reshape(1, -1)      # [1, 3*H*Dp]
    wo = jnp.concatenate(
        [_pad2(p["wo"][h * d:(h + 1) * d, :], d_pad, d_pad) for h in range(num_heads)],
        axis=0)                                               # [H*Dp, Dp]
    return {
        "ln1_g": _pad_row(p["ln1_g"], d_pad), "ln1_b": _pad_row(p["ln1_b"], d_pad),
        "w_qkv": w_qkv, "b_qkv": b_qkv,
        "wo": wo, "bo": _pad_row(p["bo"], d_pad),
        "ln2_g": _pad_row(p["ln2_g"], d_pad), "ln2_b": _pad_row(p["ln2_b"], d_pad),
        "w1": _pad2(p["w1"], d_pad, d_pad), "b1": _pad_row(p["b1"], d_pad),
        "w2": _pad2(p["w2"], d_pad, d_pad), "b2": _pad_row(p["b2"], d_pad),
    }


# ------------------------------ wrapper ------------------------------
def graphormer_encoder(x, adj, layer_params, num_heads, *, matmul_dtype=jnp.bfloat16):
    """Runs the whole encoder (all layers, all graphs) in ONE pallas_call.

    x:   [B, N, D]   node features of B independent graphs (ptr=None path per graph)
    adj: [B, N, N]   dense {0,1} adjacency masks (built from edge_index in glue)
    """
    B, N, D = x.shape
    L = len(layer_params)
    Dp = max(LANE, _round_up(D, LANE))

    fused = [_fuse_and_pad_layer(p, D, num_heads, Dp) for p in layer_params]
    stacked = {k: jnp.stack([f[k] for f in fused]) for k in _STACK_KEYS}
    x_p = jnp.pad(x, ((0, 0), (0, 0), (0, Dp - D)))

    def graph_spec(shape):           # constant over the layer axis -> 1 DMA per graph
        return pl.BlockSpec((1,) + tuple(shape[1:]), lambda b, l: (b, 0, 0))

    def layer_spec(shape):           # layer l's slice, double-buffered over l
        return pl.BlockSpec((1,) + tuple(shape[1:]), lambda b, l: (l, 0, 0))

    in_specs = [graph_spec(x_p.shape), graph_spec(adj.shape)]
    in_specs += [layer_spec(stacked[k].shape) for k in _STACK_KEYS]
    args = (x_p, adj) + tuple(stacked[k] for k in _STACK_KEYS)

    kernel = functools.partial(_encoder_kernel, num_heads, Dp, D, matmul_dtype)
    out = pl.pallas_call(
        kernel,
        out_shape=jax.ShapeDtypeStruct((B, N, Dp), jnp.float32),
        grid=(B, L),
        in_specs=in_specs,
        out_specs=pl.BlockSpec((1, N, Dp), lambda b, l: (b, 0, 0)),
        compiler_params=pltpu.CompilerParams(
            # graphs are independent (parallel -> 2nd TC on v7x); the layer
            # axis is the carry chain and must stay sequential ("arbitrary").
            dimension_semantics=("parallel", "arbitrary"),
            vmem_limit_bytes=48 * 1024 * 1024),
    )(*args)
    return out[:, :, :D]


# ---------------- plain-JAX reference (verification only) ----------------
def _layer_norm_ref(x, gamma, beta):
    mean = jnp.mean(x, axis=-1, keepdims=True)
    var = jnp.mean((x - mean) ** 2, axis=-1, keepdims=True)
    return (x - mean) * lax.rsqrt(var + LN_EPS) * gamma + beta


def _ref_layer(x, adj, p, num_heads):
    h = _layer_norm_ref(x, p["ln1_g"], p["ln1_b"])
    heads_out = []
    for hp in p["heads"]:
        q = h @ hp["wq"] + hp["bq"]
        k = h @ hp["wk"] + hp["bk"]
        v = h @ hp["wv"] + hp["bv"]
        a = (q @ k.T) / (q.shape[-1] ** 0.5)
        a = a * adj + (1.0 - adj) * NEG_INF      # exact PyTorch formula
        heads_out.append(jax.nn.softmax(a, axis=-1) @ v)
    attn = jnp.concatenate(heads_out, axis=-1) @ p["wo"] + p["bo"]
    x_prime = attn + x
    h2 = _layer_norm_ref(x_prime, p["ln2_g"], p["ln2_b"])
    ff = jnp.maximum(h2 @ p["w1"] + p["b1"], 0.0) @ p["w2"] + p["b2"]
    return ff + x_prime


def _ref_encoder(x, adj, layer_params, num_heads):
    for p in layer_params:
        x = _ref_layer(x, adj, p, num_heads)
    return x


# ---------------- deterministic parameter construction ----------------
def _linear_init(key, fan_in, fan_out):
    # PyTorch default nn.Linear init: U(-1/sqrt(fan_in), 1/sqrt(fan_in)).
    kw, kb = jax.random.split(key)
    bound = 1.0 / math.sqrt(fan_in)
    w = jax.random.uniform(kw, (fan_out, fan_in), jnp.float32, -bound, bound)
    b = jax.random.uniform(kb, (fan_out,), jnp.float32, -bound, bound)
    return w.T, b            # [in, out] layout


def make_layer_params(key, node_dim, num_heads):
    D, H = node_dim, num_heads
    keys = jax.random.split(key, 3 * H + 3)
    heads = []
    for h in range(H):
        wq, bq = _linear_init(keys[3 * h + 0], D, D)
        wk, bk = _linear_init(keys[3 * h + 1], D, D)
        wv, bv = _linear_init(keys[3 * h + 2], D, D)
        heads.append({"wq": wq, "bq": bq, "wk": wk, "bk": bk, "wv": wv, "bv": bv})
    wo, bo = _linear_init(keys[3 * H + 0], H * D, D)
    w1, b1 = _linear_init(keys[3 * H + 1], D, D)
    w2, b2 = _linear_init(keys[3 * H + 2], D, D)
    return {"heads": heads, "wo": wo, "bo": bo,
            "ln1_g": jnp.ones((D,), jnp.float32), "ln1_b": jnp.zeros((D,), jnp.float32),
            "ln2_g": jnp.ones((D,), jnp.float32), "ln2_b": jnp.zeros((D,), jnp.float32),
            "w1": w1, "b1": b1, "w2": w2, "b2": b2}


if __name__ == "__main__":
    B = 2          # independent graphs in the batch (parallel grid axis)
    N = 8          # nodes per graph
    D = 32         # node_dim
    H = 2          # num_heads
    LAYERS = 2
    MAX_PATH_DISTANCE = 5  # unused by the simplified module

    root = jax.random.PRNGKey(0)
    kx, kp = jax.random.split(root)

    x = jax.random.normal(kx, (B, N, D), jnp.float32)

    # deterministic edge_index per graph (ring with different strides + self
    # loops); the dense adjacency scatter is done in glue, exactly as the
    # PyTorch forward does: adjacency[edge_index[0], edge_index[1]] = 1
    def make_adj(step):
        src = jnp.concatenate([jnp.arange(N), jnp.arange(N)])
        dst = jnp.concatenate([(jnp.arange(N) + step) % N, jnp.arange(N)])
        edge_index = jnp.stack([src, dst])
        return jnp.zeros((N, N), jnp.float32).at[edge_index[0], edge_index[1]].set(1.0)

    adj = jnp.stack([make_adj(1), make_adj(2)])

    layer_params = [make_layer_params(k, D, H) for k in jax.random.split(kp, LAYERS)]

    ref = jnp.stack([_ref_encoder(x[b], adj[b], layer_params, H) for b in range(B)])

    # 1) f32 MXU operands: faithful-precision check (approx reciprocal only delta).
    out_f32 = jax.block_until_ready(
        graphormer_encoder(x, adj, layer_params, H, matmul_dtype=jnp.float32))
    assert out_f32.shape == (B, N, D)
    assert jnp.allclose(out_f32, ref, rtol=5e-3, atol=5e-3), "f32 kernel mismatch"

    # 2) bf16 QK^T / PV operands (f32 accumulation): v6e/v7x fast MXU path.
    out_bf16 = jax.block_until_ready(
        graphormer_encoder(x, adj, layer_params, H, matmul_dtype=jnp.bfloat16))
    assert out_bf16.shape == (B, N, D)
    assert jnp.allclose(out_bf16, ref, rtol=5e-2, atol=5e-2), "bf16 kernel mismatch"

    print("KERNEL_OK")
</pallas_src>

<mosaic_0001>
module attributes {stable_mosaic.version = 11 : i64} {
  func.func @_encoder_kernel(%arg0: i32, %arg1: i32, %arg2: memref<1x8x128xf32, #tpu.memory_space<vmem>>, %arg3: memref<1x8x8xf32, #tpu.memory_space<vmem>>, %arg4: memref<1x1x128xf32, #tpu.memory_space<vmem>>, %arg5: memref<1x1x128xf32, #tpu.memory_space<vmem>>, %arg6: memref<1x128x768xf32, #tpu.memory_space<vmem>>, %arg7: memref<1x1x768xf32, #tpu.memory_space<vmem>>, %arg8: memref<1x256x128xf32, #tpu.memory_space<vmem>>, %arg9: memref<1x1x128xf32, #tpu.memory_space<vmem>>, %arg10: memref<1x1x128xf32, #tpu.memory_space<vmem>>, %arg11: memref<1x1x128xf32, #tpu.memory_space<vmem>>, %arg12: memref<1x128x128xf32, #tpu.memory_space<vmem>>, %arg13: memref<1x1x128xf32, #tpu.memory_space<vmem>>, %arg14: memref<1x128x128xf32, #tpu.memory_space<vmem>>, %arg15: memref<1x1x128xf32, #tpu.memory_space<vmem>>, %arg16: memref<1x8x128xf32, #tpu.memory_space<vmem>>) attributes {dimension_semantics = [#tpu.dimension_semantics<parallel>, #tpu.dimension_semantics<arbitrary>], iteration_bounds = array<i64: 2, 2>, scalar_prefetch = 0 : i64, scratch_operands = 0 : i64, tpu.core_type = #tpu.core_type<tc>, window_params = [{transform_indices = @transform_0, window_bounds = array<i64: 1, 8, 128>}, {transform_indices = @transform_1, window_bounds = array<i64: 1, 8, 8>}, {transform_indices = @transform_2, window_bounds = array<i64: 1, 1, 128>}, {transform_indices = @transform_3, window_bounds = array<i64: 1, 1, 128>}, {transform_indices = @transform_4, window_bounds = array<i64: 1, 128, 768>}, {transform_indices = @transform_5, window_bounds = array<i64: 1, 1, 768>}, {transform_indices = @transform_6, window_bounds = array<i64: 1, 256, 128>}, {transform_indices = @transform_7, window_bounds = array<i64: 1, 1, 128>}, {transform_indices = @transform_8, window_bounds = array<i64: 1, 1, 128>}, {transform_indices = @transform_9, window_bounds = array<i64: 1, 1, 128>}, {transform_indices = @transform_10, window_bounds = array<i64: 1, 128, 128>}, {transform_indices = @transform_11, window_bounds = array<i64: 1, 1, 128>}, {transform_indices = @transform_12, window_bounds = array<i64: 1, 128, 128>}, {transform_indices = @transform_13, window_bounds = array<i64: 1, 1, 128>}, {transform_indices = @transform_14, window_bounds = array<i64: 1, 8, 128>}]} {
    %c0_i32 = arith.constant 0 : i32
    %0 = arith.cmpi eq, %arg1, %c0_i32 : i32
    %1 = arith.extui %0 : i1 to i32
    %c0_i32_0 = arith.constant 0 : i32
    %2 = arith.cmpi ne, %1, %c0_i32_0 : i32
    scf.if %2 {
      %c0_71 = arith.constant 0 : index
      %c0_72 = arith.constant 0 : index
      %c0_73 = arith.constant 0 : index
      %139 = vector.load %arg2[%c0_71, %c0_72, %c0_73] : memref<1x8x128xf32, #tpu.memory_space<vmem>>, vector<1x8x128xf32>
      %140 = vector.shape_cast %139 : vector<1x8x128xf32> to vector<8x128xf32>
      %c0_74 = arith.constant 0 : index
      %c0_75 = arith.constant 0 : index
      %c0_76 = arith.constant 0 : index
      %141 = vector.load %arg16[%c0_74, %c0_75, %c0_76] : memref<1x8x128xf32, #tpu.memory_space<vmem>>, vector<1x8x128xf32>
      %142 = vector.shape_cast %141 : vector<1x8x128xf32> to vector<8x128xf32>
      %143 = vector.shape_cast %140 : vector<8x128xf32> to vector<1x8x128xf32>
      tpu.vector_store %arg16[%c0_74, %c0_75, %c0_76], %143 {strides = array<i32>} : memref<1x8x128xf32, #tpu.memory_space<vmem>>, vector<1x8x128xf32>,
    } else {
    }
    %c0 = arith.constant 0 : index
    %c0_1 = arith.constant 0 : index
    %c0_2 = arith.constant 0 : index
    %3 = vector.load %arg16[%c0, %c0_1, %c0_2] : memref<1x8x128xf32, #tpu.memory_space<vmem>>, vector<1x8x128xf32>
    %4 = vector.shape_cast %3 : vector<1x8x128xf32> to vector<8x128xf32>
    %c0_3 = arith.constant 0 : index
    %c0_4 = arith.constant 0 : index
    %c0_5 = arith.constant 0 : index
    %5 = vector.load %arg3[%c0_3, %c0_4, %c0_5] : memref<1x8x8xf32, #tpu.memory_space<vmem>>, vector<1x8x8xf32>
    %6 = vector.shape_cast %5 : vector<1x8x8xf32> to vector<8x8xf32>
    %cst = arith.constant 0.000000e+00 : f32
    %7 = vector.broadcast %cst : f32 to vector<8x8xf32>
    %8 = arith.cmpf ogt, %6, %7 : vector<8x8xf32>
    %9 = tpu.iota {dimensions = array<i32: 1>} : vector<1x128xi32>
    %c32_i32 = arith.constant 32 : i32
    %10 = vector.broadcast %c32_i32 : i32 to vector<1x128xi32>
    %11 = arith.cmpi slt, %9, %10 : vector<1x128xi32>
    %12 = arith.extui %11 : vector<1x128xi1> to vector<1x128xi32>
    %13 = arith.sitofp %12 : vector<1x128xi32> to vector<1x128xf32>
    %c0_6 = arith.constant 0 : index
    %c0_7 = arith.constant 0 : index
    %c0_8 = arith.constant 0 : index
    %14 = vector.load %arg4[%c0_6, %c0_7, %c0_8] : memref<1x1x128xf32, #tpu.memory_space<vmem>>, vector<1x1x128xf32>
    %15 = vector.shape_cast %14 : vector<1x1x128xf32> to vector<1x128xf32>
    %c0_9 = arith.constant 0 : index
    %c0_10 = arith.constant 0 : index
    %c0_11 = arith.constant 0 : index
    %16 = vector.load %arg5[%c0_9, %c0_10, %c0_11] : memref<1x1x128xf32, #tpu.memory_space<vmem>>, vector<1x1x128xf32>
    %17 = vector.shape_cast %16 : vector<1x1x128xf32> to vector<1x128xf32>
    %cst_12 = arith.constant dense<0.000000e+00> : vector<8xf32>
    %18 = vector.multi_reduction <add>, %4, %cst_12 [1] : vector<8x128xf32> to vector<8xf32>
    %19 = vector.shape_cast %18 : vector<8xf32> to vector<8x1xf32>
    %cst_13 = arith.constant 3.125000e-02 : f32
    %20 = vector.broadcast %cst_13 : f32 to vector<8x1xf32>
    %21 = arith.mulf %19, %20 : vector<8x1xf32>
    %22 = vector.broadcast %21 : vector<8x1xf32> to vector<8x128xf32>
    %23 = arith.subf %4, %22 : vector<8x128xf32>
    %24 = vector.broadcast %13 : vector<1x128xf32> to vector<8x128xf32>
    %25 = arith.mulf %23, %24 : vector<8x128xf32>
    %26 = arith.mulf %25, %25 : vector<8x128xf32>
    %cst_14 = arith.constant dense<0.000000e+00> : vector<8xf32>
    %27 = vector.multi_reduction <add>, %26, %cst_14 [1] : vector<8x128xf32> to vector<8xf32>
    %28 = vector.shape_cast %27 : vector<8xf32> to vector<8x1xf32>
    %cst_15 = arith.constant 3.125000e-02 : f32
    %29 = vector.broadcast %cst_15 : f32 to vector<8x1xf32>
    %30 = arith.mulf %28, %29 : vector<8x1xf32>
    %cst_16 = arith.constant 9.99999974E-6 : f32
    %31 = vector.broadcast %cst_16 : f32 to vector<8x1xf32>
    %32 = arith.addf %30, %31 : vector<8x1xf32>
    %33 = math.rsqrt %32 : vector<8x1xf32>
    %34 = vector.broadcast %33 : vector<8x1xf32> to vector<8x128xf32>
    %35 = arith.mulf %25, %34 : vector<8x128xf32>
    %36 = vector.broadcast %15 : vector<1x128xf32> to vector<8x128xf32>
    %37 = arith.mulf %35, %36 : vector<8x128xf32>
    %38 = vector.broadcast %17 : vector<1x128xf32> to vector<8x128xf32>
    %39 = arith.addf %37, %38 : vector<8x128xf32>
    %c0_17 = arith.constant 0 : index
    %c0_18 = arith.constant 0 : index
    %c0_19 = arith.constant 0 : index
    %40 = vector.load %arg6[%c0_17, %c0_18, %c0_19] : memref<1x128x768xf32, #tpu.memory_space<vmem>>, vector<1x128x768xf32>
    %41 = vector.shape_cast %40 : vector<1x128x768xf32> to vector<128x768xf32>
    %cst_20 = arith.constant dense<0.000000e+00> : vector<8x768xf32>
    %42 = tpu.matmul %39, %41, %cst_20 {dimension_numbers = #tpu.dot_dimension_numbers<[1], [0], [0], [1], [0, 0, 1, 1], [], []>} : vector<8x128xf32>, vector<128x768xf32>, vector<8x768xf32> -> vector<8x768xf32>
    %c0_21 = arith.constant 0 : index
    %c0_22 = arith.constant 0 : index
    %c0_23 = arith.constant 0 : index
    %43 = vector.load %arg7[%c0_21, %c0_22, %c0_23] : memref<1x1x768xf32, #tpu.memory_space<vmem>>, vector<1x1x768xf32>
    %44 = vector.shape_cast %43 : vector<1x1x768xf32> to vector<1x768xf32>
    %45 = vector.broadcast %44 : vector<1x768xf32> to vector<8x768xf32>
    %46 = arith.addf %42, %45 : vector<8x768xf32>
    %c0_24 = arith.constant 0 : index
    %c0_25 = arith.constant 0 : index
    %c0_26 = arith.constant 0 : index
    %47 = vector.load %arg8[%c0_24, %c0_25, %c0_26] : memref<1x256x128xf32, #tpu.memory_space<vmem>>, vector<1x256x128xf32>
    %48 = vector.shape_cast %47 : vector<1x256x128xf32> to vector<256x128xf32>
    %49 = vector.extract_strided_slice %46 {offsets = [0, 0], sizes = [8, 128], strides = [1, 1]} : vector<8x768xf32> to vector<8x128xf32>
    %50 = vector.extract_strided_slice %46 {offsets = [0, 256], sizes = [8, 128], strides = [1, 1]} : vector<8x768xf32> to vector<8x128xf32>
    %51 = vector.extract_strided_slice %46 {offsets = [0, 512], sizes = [8, 128], strides = [1, 1]} : vector<8x768xf32> to vector<8x128xf32>
    %cst_27 = arith.constant dense<0.000000e+00> : vector<8x8xf32>
    %52 = tpu.matmul %49, %50, %cst_27 {dimension_numbers = #tpu.dot_dimension_numbers<[1], [1], [0], [0], [0, 0, 1, 0], [], []>} : vector<8x128xf32>, vector<8x128xf32>, vector<8x8xf32> -> vector<8x8xf32>
    %cst_28 = arith.constant -1.000000e+06 : f32
    %53 = vector.broadcast %cst_28 : f32 to vector<8x8xf32>
    %54 = arith.select %8, %52, %53 : vector<8x8xi1>, vector<8x8xf32>
    %cst_29 = arith.constant dense<0xFF800000> : vector<8xf32>
    %55 = vector.multi_reduction <maximumf>, %54, %cst_29 [1] : vector<8x8xf32> to vector<8xf32>
    %56 = vector.shape_cast %55 : vector<8xf32> to vector<8x1xf32>
    %57 = vector.broadcast %56 : vector<8x1xf32> to vector<8x8xf32>
    %58 = arith.subf %54, %57 : vector<8x8xf32>
    %59 = math.exp %58 : vector<8x8xf32>
    %cst_30 = arith.constant dense<0.000000e+00> : vector<8xf32>
    %60 = vector.multi_reduction <add>, %59, %cst_30 [1] : vector<8x8xf32> to vector<8xf32>
    %61 = vector.shape_cast %60 : vector<8xf32> to vector<8x1xf32>
    %62 = tpu.reciprocal %61 {approx = true} : vector<8x1xf32> -> vector<8x1xf32>
    %cst_31 = arith.constant dense<0.000000e+00> : vector<8x128xf32>
    %63 = tpu.matmul %59, %51, %cst_31 {dimension_numbers = #tpu.dot_dimension_numbers<[1], [0], [0], [1], [0, 0, 1, 1], [], []>} : vector<8x8xf32>, vector<8x128xf32>, vector<8x128xf32> -> vector<8x128xf32>
    %64 = vector.broadcast %62 : vector<8x1xf32> to vector<8x128xf32>
    %65 = arith.mulf %63, %64 : vector<8x128xf32>
    %66 = vector.extract_strided_slice %48 {offsets = [0, 0], sizes = [128, 128], strides = [1, 1]} : vector<256x128xf32> to vector<128x128xf32>
    %cst_32 = arith.constant dense<0.000000e+00> : vector<8x128xf32>
    %67 = tpu.matmul %65, %66, %cst_32 {dimension_numbers = #tpu.dot_dimension_numbers<[1], [0], [0], [1], [0, 0, 1, 1], [], []>} : vector<8x128xf32>, vector<128x128xf32>, vector<8x128xf32> -> vector<8x128xf32>
    %68 = vector.extract_strided_slice %46 {offsets = [0, 128], sizes = [8, 128], strides = [1, 1]} : vector<8x768xf32> to vector<8x128xf32>
    %69 = vector.extract_strided_slice %46 {offsets = [0, 384], sizes = [8, 128], strides = [1, 1]} : vector<8x768xf32> to vector<8x128xf32>
    %70 = vector.extract_strided_slice %46 {offsets = [0, 640], sizes = [8, 128], strides = [1, 1]} : vector<8x768xf32> to vector<8x128xf32>
    %cst_33 = arith.constant dense<0.000000e+00> : vector<8x8xf32>
    %71 = tpu.matmul %68, %69, %cst_33 {dimension_numbers = #tpu.dot_dimension_numbers<[1], [1], [0], [0], [0, 0, 1, 0], [], []>} : vector<8x128xf32>, vector<8x128xf32>, vector<8x8xf32> -> vector<8x8xf32>
    %cst_34 = arith.constant -1.000000e+06 : f32
    %72 = vector.broadcast %cst_34 : f32 to vector<8x8xf32>
    %73 = arith.select %8, %71, %72 : vector<8x8xi1>, vector<8x8xf32>
    %cst_35 = arith.constant dense<0xFF800000> : vector<8xf32>
    %74 = vector.multi_reduction <maximumf>, %73, %cst_35 [1] : vector<8x8xf32> to vector<8xf32>
    %75 = vector.shape_cast %74 : vector<8xf32> to vector<8x1xf32>
    %76 = vector.broadcast %75 : vector<8x1xf32> to vector<8x8xf32>
    %77 = arith.subf %73, %76 : vector<8x8xf32>
    %78 = math.exp %77 : vector<8x8xf32>
    %cst_36 = arith.constant dense<0.000000e+00> : vector<8xf32>
    %79 = vector.multi_reduction <add>, %78, %cst_36 [1] : vector<8x8xf32> to vector<8xf32>
    %80 = vector.shape_cast %79 : vector<8xf32> to vector<8x1xf32>
    %81 = tpu.reciprocal %80 {approx = true} : vector<8x1xf32> -> vector<8x1xf32>
    %cst_37 = arith.constant dense<0.000000e+00> : vector<8x128xf32>
    %82 = tpu.matmul %78, %70, %cst_37 {dimension_numbers = #tpu.dot_dimension_numbers<[1], [0], [0], [1], [0, 0, 1, 1], [], []>} : vector<8x8xf32>, vector<8x128xf32>, vector<8x128xf32> -> vector<8x128xf32>
    %83 = vector.broadcast %81 : vector<8x1xf32> to vector<8x128xf32>
    %84 = arith.mulf %82, %83 : vector<8x128xf32>
    %85 = vector.extract_strided_slice %48 {offsets = [128, 0], sizes = [128, 128], strides = [1, 1]} : vector<256x128xf32> to vector<128x128xf32>
    %cst_38 = arith.constant dense<0.000000e+00> : vector<8x128xf32>
    %86 = tpu.matmul %84, %85, %cst_38 {dimension_numbers = #tpu.dot_dimension_numbers<[1], [0], [0], [1], [0, 0, 1, 1], [], []>} : vector<8x128xf32>, vector<128x128xf32>, vector<8x128xf32> -> vector<8x128xf32>
    %87 = arith.addf %67, %86 : vector<8x128xf32>
    %c0_39 = arith.constant 0 : index
    %c0_40 = arith.constant 0 : index
    %c0_41 = arith.constant 0 : index
    %88 = vector.load %arg9[%c0_39, %c0_40, %c0_41] : memref<1x1x128xf32, #tpu.memory_space<vmem>>, vector<1x1x128xf32>
    %89 = vector.shape_cast %88 : vector<1x1x128xf32> to vector<1x128xf32>
    %90 = vector.broadcast %89 : vector<1x128xf32> to vector<8x128xf32>
    %91 = arith.addf %87, %90 : vector<8x128xf32>
    %92 = arith.addf %91, %4 : vector<8x128xf32>
    %c0_42 = arith.constant 0 : index
    %c0_43 = arith.constant 0 : index
    %c0_44 = arith.constant 0 : index
    %93 = vector.load %arg10[%c0_42, %c0_43, %c0_44] : memref<1x1x128xf32, #tpu.memory_space<vmem>>, vector<1x1x128xf32>
    %94 = vector.shape_cast %93 : vector<1x1x128xf32> to vector<1x128xf32>
    %c0_45 = arith.constant 0 : index
    %c0_46 = arith.constant 0 : index
    %c0_47 = arith.constant 0 : index
    %95 = vector.load %arg11[%c0_45, %c0_46, %c0_47] : memref<1x1x128xf32, #tpu.memory_space<vmem>>, vector<1x1x128xf32>
    %96 = vector.shape_cast %95 : vector<1x1x128xf32> to vector<1x128xf32>
    %cst_48 = arith.constant dense<0.000000e+00> : vector<8xf32>
    %97 = vector.multi_reduction <add>, %92, %cst_48 [1] : vector<8x128xf32> to vector<8xf32>
    %98 = vector.shape_cast %97 : vector<8xf32> to vector<8x1xf32>
    %cst_49 = arith.constant 3.125000e-02 : f32
    %99 = vector.broadcast %cst_49 : f32 to vector<8x1xf32>
    %100 = arith.mulf %98, %99 : vector<8x1xf32>
    %101 = vector.broadcast %100 : vector<8x1xf32> to vector<8x128xf32>
    %102 = arith.subf %92, %101 : vector<8x128xf32>
    %103 = vector.broadcast %13 : vector<1x128xf32> to vector<8x128xf32>
    %104 = arith.mulf %102, %103 : vector<8x128xf32>
    %105 = arith.mulf %104, %104 : vector<8x128xf32>
    %cst_50 = arith.constant dense<0.000000e+00> : vector<8xf32>
    %106 = vector.multi_reduction <add>, %105, %cst_50 [1] : vector<8x128xf32> to vector<8xf32>
    %107 = vector.shape_cast %106 : vector<8xf32> to vector<8x1xf32>
    %cst_51 = arith.constant 3.125000e-02 : f32
    %108 = vector.broadcast %cst_51 : f32 to vector<8x1xf32>
    %109 = arith.mulf %107, %108 : vector<8x1xf32>
    %cst_52 = arith.constant 9.99999974E-6 : f32
    %110 = vector.broadcast %cst_52 : f32 to vector<8x1xf32>
    %111 = arith.addf %109, %110 : vector<8x1xf32>
    %112 = math.rsqrt %111 : vector<8x1xf32>
    %113 = vector.broadcast %112 : vector<8x1xf32> to vector<8x128xf32>
    %114 = arith.mulf %104, %113 : vector<8x128xf32>
    %115 = vector.broadcast %94 : vector<1x128xf32> to vector<8x128xf32>
    %116 = arith.mulf %114, %115 : vector<8x128xf32>
    %117 = vector.broadcast %96 : vector<1x128xf32> to vector<8x128xf32>
    %118 = arith.addf %116, %117 : vector<8x128xf32>
    %c0_53 = arith.constant 0 : index
    %c0_54 = arith.constant 0 : index
    %c0_55 = arith.constant 0 : index
    %119 = vector.load %arg12[%c0_53, %c0_54, %c0_55] : memref<1x128x128xf32, #tpu.memory_space<vmem>>, vector<1x128x128xf32>
    %120 = vector.shape_cast %119 : vector<1x128x128xf32> to vector<128x128xf32>
    %cst_56 = arith.constant dense<0.000000e+00> : vector<8x128xf32>
    %121 = tpu.matmul %118, %120, %cst_56 {dimension_numbers = #tpu.dot_dimension_numbers<[1], [0], [0], [1], [0, 0, 1, 1], [], []>} : vector<8x128xf32>, vector<128x128xf32>, vector<8x128xf32> -> vector<8x128xf32>
    %c0_57 = arith.constant 0 : index
    %c0_58 = arith.constant 0 : index
    %c0_59 = arith.constant 0 : index
    %122 = vector.load %arg13[%c0_57, %c0_58, %c0_59] : memref<1x1x128xf32, #tpu.memory_space<vmem>>, vector<1x1x128xf32>
    %123 = vector.shape_cast %122 : vector<1x1x128xf32> to vector<1x128xf32>
    %124 = vector.broadcast %123 : vector<1x128xf32> to vector<8x128xf32>
    %125 = arith.addf %121, %124 : vector<8x128xf32>
    %cst_60 = arith.constant 0.000000e+00 : f32
    %126 = vector.broadcast %cst_60 : f32 to vector<8x128xf32>
    %127 = arith.maximumf %125, %126 : vector<8x128xf32>
    %c0_61 = arith.constant 0 : index
    %c0_62 = arith.constant 0 : index
    %c0_63 = arith.constant 0 : index
    %128 = vector.load %arg14[%c0_61, %c0_62, %c0_63] : memref<1x128x128xf32, #tpu.memory_space<vmem>>, vector<1x128x128xf32>
    %129 = vector.shape_cast %128 : vector<1x128x128xf32> to vector<128x128xf32>
    %cst_64 = arith.constant dense<0.000000e+00> : vector<8x128xf32>
    %130 = tpu.matmul %127, %129, %cst_64 {dimension_numbers = #tpu.dot_dimension_numbers<[1], [0], [0], [1], [0, 0, 1, 1], [], []>} : vector<8x128xf32>, vector<128x128xf32>, vector<8x128xf32> -> vector<8x128xf32>
    %c0_65 = arith.constant 0 : index
    %c0_66 = arith.constant 0 : index
    %c0_67 = arith.constant 0 : index
    %131 = vector.load %arg15[%c0_65, %c0_66, %c0_67] : memref<1x1x128xf32, #tpu.memory_space<vmem>>, vector<1x1x128xf32>
    %132 = vector.shape_cast %131 : vector<1x1x128xf32> to vector<1x128xf32>
    %133 = vector.broadcast %132 : vector<1x128xf32> to vector<8x128xf32>
    %134 = arith.addf %130, %133 : vector<8x128xf32>
    %135 = arith.addf %134, %92 : vector<8x128xf32>
    %c0_68 = arith.constant 0 : index
    %c0_69 = arith.constant 0 : index
    %c0_70 = arith.constant 0 : index
    %136 = vector.load %arg16[%c0_68, %c0_69, %c0_70] : memref<1x8x128xf32, #tpu.memory_space<vmem>>, vector<1x8x128xf32>
    %137 = vector.shape_cast %136 : vector<1x8x128xf32> to vector<8x128xf32>
    %138 = vector.shape_cast %135 : vector<8x128xf32> to vector<1x8x128xf32>
    tpu.vector_store %arg16[%c0_68, %c0_69, %c0_70], %138 {strides = array<i32>} : memref<1x8x128xf32, #tpu.memory_space<vmem>>, vector<1x8x128xf32>,
    return
  }
  func.func @transform_0(%arg0: i32, %arg1: i32) -> (i32, i32, i32) {
    %c0_i32 = arith.constant 0 : i32
    %c0_i32_0 = arith.constant 0 : i32
    %c0_i32_1 = arith.constant 0 : i32
    return %arg0, %c0_i32, %c0_i32_0 : i32, i32, i32
  }
  func.func @transform_1(%arg0: i32, %arg1: i32) -> (i32, i32, i32) {
    %c0_i32 = arith.constant 0 : i32
    %c0_i32_0 = arith.constant 0 : i32
    %c0_i32_1 = arith.constant 0 : i32
    return %arg0, %c0_i32, %c0_i32_0 : i32, i32, i32
  }
  func.func @transform_2(%arg0: i32, %arg1: i32) -> (i32, i32, i32) {
    %c0_i32 = arith.constant 0 : i32
    %c0_i32_0 = arith.constant 0 : i32
    %c0_i32_1 = arith.constant 0 : i32
    return %arg1, %c0_i32, %c0_i32_0 : i32, i32, i32
  }
  func.func @transform_3(%arg0: i32, %arg1: i32) -> (i32, i32, i32) {
    %c0_i32 = arith.constant 0 : i32
    %c0_i32_0 = arith.constant 0 : i32
    %c0_i32_1 = arith.constant 0 : i32
    return %arg1, %c0_i32, %c0_i32_0 : i32, i32, i32
  }
  func.func @transform_4(%arg0: i32, %arg1: i32) -> (i32, i32, i32) {
    %c0_i32 = arith.constant 0 : i32
    %c0_i32_0 = arith.constant 0 : i32
    %c0_i32_1 = arith.constant 0 : i32
    return %arg1, %c0_i32, %c0_i32_0 : i32, i32, i32
  }
  func.func @transform_5(%arg0: i32, %arg1: i32) -> (i32, i32, i32) {
    %c0_i32 = arith.constant 0 : i32
    %c0_i32_0 = arith.constant 0 : i32
    %c0_i32_1 = arith.constant 0 : i32
    return %arg1, %c0_i32, %c0_i32_0 : i32, i32, i32
  }
  func.func @transform_6(%arg0: i32, %arg1: i32) -> (i32, i32, i32) {
    %c0_i32 = arith.constant 0 : i32
    %c0_i32_0 = arith.constant 0 : i32
    %c0_i32_1 = arith.constant 0 : i32
    return %arg1, %c0_i32, %c0_i32_0 : i32, i32, i32
  }
  func.func @transform_7(%arg0: i32, %arg1: i32) -> (i32, i32, i32) {
    %c0_i32 = arith.constant 0 : i32
    %c0_i32_0 = arith.constant 0 : i32
    %c0_i32_1 = arith.constant 0 : i32
    return %arg1, %c0_i32, %c0_i32_0 : i32, i32, i32
  }
  func.func @transform_8(%arg0: i32, %arg1: i32) -> (i32, i32, i32) {
    %c0_i32 = arith.constant 0 : i32
    %c0_i32_0 = arith.constant 0 : i32
    %c0_i32_1 = arith.constant 0 : i32
    return %arg1, %c0_i32, %c0_i32_0 : i32, i32, i32
  }
  func.func @transform_9(%arg0: i32, %arg1: i32) -> (i32, i32, i32) {
    %c0_i32 = arith.constant 0 : i32
    %c0_i32_0 = arith.constant 0 : i32
    %c0_i32_1 = arith.constant 0 : i32
    return %arg1, %c0_i32, %c0_i32_0 : i32, i32, i32
  }
  func.func @transform_10(%arg0: i32, %arg1: i32) -> (i32, i32, i32) {
    %c0_i32 = arith.constant 0 : i32
    %c0_i32_0 = arith.constant 0 : i32
    %c0_i32_1 = arith.constant 0 : i32
    return %arg1, %c0_i32, %c0_i32_0 : i32, i32, i32
  }
  func.func @transform_11(%arg0: i32, %arg1: i32) -> (i32, i32, i32) {
    %c0_i32 = arith.constant 0 : i32
    %c0_i32_0 = arith.constant 0 : i32
    %c0_i32_1 = arith.constant 0 : i32
    return %arg1, %c0_i32, %c0_i32_0 : i32, i32, i32
  }
  func.func @transform_12(%arg0: i32, %arg1: i32) -> (i32, i32, i32) {
    %c0_i32 = arith.constant 0 : i32
    %c0_i32_0 = arith.constant 0 : i32
    %c0_i32_1 = arith.constant 0 : i32
    return %arg1, %c0_i32, %c0_i32_0 : i32, i32, i32
  }
  func.func @transform_13(%arg0: i32, %arg1: i32) -> (i32, i32, i32) {
    %c0_i32 = arith.constant 0 : i32
    %c0_i32_0 = arith.constant 0 : i32
    %c0_i32_1 = arith.constant 0 : i32
    return %arg1, %c0_i32, %c0_i32_0 : i32, i32, i32
  }
  func.func @transform_14(%arg0: i32, %arg1: i32) -> (i32, i32, i32) {
    %c0_i32 = arith.constant 0 : i32
    %c0_i32_0 = arith.constant 0 : i32
    %c0_i32_1 = arith.constant 0 : i32
    return %arg0, %c0_i32, %c0_i32_0 : i32, i32, i32
  }
}

</mosaic_0001>

<llo_original>
// kernel: tpu_custom_call.1
$region0: #{tpu_custom_call.1}
  #allocation0 [shape = 'u32[]', space=smem, size = 0x4, offset = 0x4, fixed_abs, tag = 'smem constant byte address 0x4 - core index']
  #allocation1 [shape = 'u32[144,128]{1,0:T(1,128)}', space=vmem, size = 0x12000, scoped, tag = 'internal scratch']
  %s0 = inlined_call_operand.hbm [shape: f32[2,8,128], index: 0, kind: input, shape index: {}]
  %s1 = inlined_call_operand.hbm [shape: f32[2,8,8], index: 1, kind: input, shape index: {}]
  %s2 = inlined_call_operand.vmem [shape: f32[2,1,128], index: 2, kind: input, shape index: {}]
  %s3 = inlined_call_operand.vmem [shape: f32[2,1,128], index: 3, kind: input, shape index: {}]
  %s4 = inlined_call_operand.hbm [shape: f32[2,128,768], index: 4, kind: input, shape index: {}]
  %s5 = inlined_call_operand.vmem [shape: f32[2,1,768], index: 5, kind: input, shape index: {}]
  %s6 = inlined_call_operand.hbm [shape: f32[2,256,128], index: 6, kind: input, shape index: {}]
  %s7 = inlined_call_operand.vmem [shape: f32[2,1,128], index: 7, kind: input, shape index: {}]
  %s8 = inlined_call_operand.vmem [shape: f32[2,1,128], index: 8, kind: input, shape index: {}]
  %s9 = inlined_call_operand.vmem [shape: f32[2,1,128], index: 9, kind: input, shape index: {}]
  %s10 = inlined_call_operand.hbm [shape: f32[2,128,128], index: 10, kind: input, shape index: {}]
  %s11 = inlined_call_operand.vmem [shape: f32[2,1,128], index: 11, kind: input, shape index: {}]
  %s12 = inlined_call_operand.hbm [shape: f32[2,128,128], index: 12, kind: input, shape index: {}]
  %s13 = inlined_call_operand.vmem [shape: f32[2,1,128], index: 13, kind: input, shape index: {}]
  %s14 = inlined_call_operand.hbm [shape: f32[2,8,128], index: 14, kind: output, shape index: {}]
  %s15 = sld [smem:[#allocation0]]
  $region117: #{tpu_custom_call.1} parent=0
    _
  %s17 = ssub.s32 1, %s15
  %s18 = scalar_select 0, %s17, %s15
  $region1: #{tpu_custom_call.1} parent=0
    #allocation2 [shape = 'u8[8192]{0}', space=vmem, size = 0x2000, scoped, tag = 'input window, operand 0']
    #allocation3 [shape = 's32[2]{0}', space=sflag, size = 0x8, scoped, tag = 'scoped memory for tpu_custom_call.1']
    #allocation4 [shape = 's32[2]{0}', space=sflag, size = 0x8, scoped, tag = 'scoped memory for tpu_custom_call.1']
    #allocation5 [shape = 'u8[8192]{0}', space=vmem, size = 0x2000, scoped, tag = 'input window, operand 1']
    #allocation6 [shape = 's32[2]{0}', space=sflag, size = 0x8, scoped, tag = 'scoped memory for tpu_custom_call.1']
    #allocation7 [shape = 'u8[786432]{0}', space=vmem, size = 0xc0000, scoped, tag = 'input window, operand 4']
    #allocation8 [shape = 'u8[262144]{0}', space=vmem, size = 0x40000, scoped, tag = 'input window, operand 6']
    #allocation9 [shape = 's32[2]{0}', space=sflag, size = 0x8, scoped, tag = 'scoped memory for tpu_custom_call.1']
    #allocation10 [shape = 'u8[131072]{0}', space=vmem, size = 0x20000, scoped, tag = 'input window, operand 10']
    #allocation11 [shape = 'u8[131072]{0}', space=vmem, size = 0x20000, scoped, tag = 'input window, operand 12']
    #allocation12 [shape = 's32[2]{0}', space=sflag, size = 0x8, scoped, tag = 'scoped memory for tpu_custom_call.1']
    #allocation13 [shape = 'u8[8192]{0}', space=vmem, size = 0x2000, scoped, tag = 'output window, operand 0']
    %19 = vsyncpa [#allocation3], 0
    %s20 = scalar_lea.sflag [#allocation3], 1
    %21 = vsyncpa %s20, 0
    %22 = vsyncpa [#allocation6], 0
    %s23 = scalar_lea.sflag [#allocation6], 1
    %24 = vsyncpa %s23, 0
    %25 = vsyncpa [#allocation9], 0
    %s26 = scalar_lea.sflag [#allocation9], 1
    %27 = vsyncpa %s26, 0
    %28 = vsyncpa [#allocation12], 0
    %s29 = scalar_lea.sflag [#allocation12], 1
    %30 = vsyncpa %s29, 0
    %31 = vsyncpa [#allocation4], 0
    %s32 = scalar_lea.sflag [#allocation4], 1
    %33 = vsyncpa %s32, 0
    loop: start=0, step=1, limit=6
    $region2: #{tpu_custom_call.1} parent=1 // loop_pre_header
      _
    $region3: #{tpu_custom_call.1} parent=1 // loop_header
      %s35 = sphi 0, %s39
      %p36 = scmp.ge.s32.totalorder %s35, 6
      %s42 = sphi 0, %s54
      %s43 = sphi 0, %s50
      %s44 = sphi 0, %s42
      %s45 = sphi 0, %s43
      %s46 = sphi 0, %s44
      %s47 = sphi 0, %s45
      %s57 = sphi 0, %s59
      %s60 = sphi 0, %s57
      %s61 = sphi 0, %s60
      %s77 = sphi 0, %s61
      %s83 = sphi 0, %s85
      %s86 = sphi 0, %s83
      %s87 = sphi 0, %s86
      %s103 = sphi 0, %s87
      %s109 = sphi 0, %s111
      %s112 = sphi 0, %s109
      %s113 = sphi 0, %s112
      %s129 = sphi 0, %s113
      %s135 = sphi 0, %s137
      %s138 = sphi 0, %s135
      %s139 = sphi 0, %s138
      %s155 = sphi 0, %s139
      %s161 = sphi 0, %s163
      %s164 = sphi 0, %s161
      %s165 = sphi 0, %s164
      %s181 = sphi 0, %s165
      %s187 = sphi 0, %s189
      %s190 = sphi 0, %s187
      %s191 = sphi 0, %s190
      %s207 = sphi 0, %s191
      %s213 = sphi 0, %s215
      %s216 = sphi 0, %s213
      %s217 = sphi 0, %s216
      %s233 = sphi 0, %s217
      %s239 = sphi 0, %s241
      %s242 = sphi 0, %s239
      %s243 = sphi 0, %s242
      %s259 = sphi 0, %s243
      %s265 = sphi 0, %s267
      %s268 = sphi 0, %s265
      %s269 = sphi 0, %s268
      %s285 = sphi 0, %s269
      %s291 = sphi 0, %s293
      %s294 = sphi 0, %s291
      %s295 = sphi 0, %s294
      %s311 = sphi 0, %s295
      %s317 = sphi 0, %s319
      %s320 = sphi 0, %s317
      %s321 = sphi 0, %s320
      %s337 = sphi 0, %s321
      %s343 = sphi 0, %s345
      %s346 = sphi 0, %s343
      %s347 = sphi 0, %s346
      %s363 = sphi 0, %s347
      %s369 = sphi 0, %s371
      %s372 = sphi 0, %s369
      %s373 = sphi 0, %s372
      %s389 = sphi 0, %s373
      %s395 = sphi 0, %s397
      %s398 = sphi 0, %s395
      %s399 = sphi 0, %s398
      %s415 = sphi 0, %s399
      %s421 = sphi 0, %s423
      %s424 = sphi 0, %s421
      %s425 = sphi 0, %s424
      %s441 = sphi 0, %s425
    $region4: #{tpu_custom_call.1} parent=1 // loop_header_branch
      %38 = sbr.rel (%p36) target = $region8
    $region5: #{tpu_custom_call.1} parent=1 // loop_body
      %s40 = ssub.s32 %s35, 1
      %s41 = ssub.s32 %s35, 2
      %s48 = sadd.s32 1, %s43
      %p49 = scmp.ge.s32.totalorder %s48, 2
      %s50 = scalar_select %p49, 0, %s48
      %s51 = sadd.s32 1, %s42
      %s52 = scalar_select %p49, %s51, %s42
      %p53 = scmp.ge.s32.totalorder %s52, 2
      %s54 = scalar_select %p53, 0, %s52
      %s55 = ssub.s32 %s42, %s54
      %p56 = scmp.eq.s32.totalorder %s55, 0
      %s58 = sadd.s32 %s57, 1
      %s59 = scalar_select %p56, %s57, %s58
      %p62 = pneg %p56
      %p63 = scmp.eq.s32.totalorder %s35, 3
      %p64 = por %p62, %p63
      %p65 = scmp.ne.s32.totalorder %s57, %s60
      %p66 = scmp.eq.s32.totalorder %s35, 0
      %p67 = por %p65, %p66
      %p68 = scmp.ne.s32.totalorder %s57, %s60
      %p69 = scmp.eq.s32.totalorder %s40, 3
      %p70 = por %p68, %p69
      %p71 = scmp.ne.s32.totalorder %s60, %s61
      %p72 = scmp.eq.s32.totalorder %s40, 0
      %p73 = por %p71, %p72
      %p74 = scmp.ne.s32.totalorder %s60, %s61
      %p75 = scmp.eq.s32.totalorder %s41, 3
      %p76 = por %p74, %p75
      %p78 = scmp.ne.s32.totalorder %s61, %s77
      %p79 = scmp.eq.s32.totalorder %s41, 0
      %p80 = por %p78, %p79
      %s81 = ssub.s32 %s42, %s54
      %p82 = scmp.eq.s32.totalorder %s81, 0
      %s84 = sadd.s32 %s83, 1
      %s85 = scalar_select %p82, %s83, %s84
      %p88 = pneg %p82
      %p89 = scmp.eq.s32.totalorder %s35, 3
      %p90 = por %p88, %p89
      %p91 = scmp.ne.s32.totalorder %s83, %s86
      %p92 = scmp.eq.s32.totalorder %s35, 0
      %p93 = por %p91, %p92
      %p94 = scmp.ne.s32.totalorder %s83, %s86
      %p95 = scmp.eq.s32.totalorder %s40, 3
      %p96 = por %p94, %p95
      %p97 = scmp.ne.s32.totalorder %s86, %s87
      %p98 = scmp.eq.s32.totalorder %s40, 0
      %p99 = por %p97, %p98
      %p100 = scmp.ne.s32.totalorder %s86, %s87
      %p101 = scmp.eq.s32.totalorder %s41, 3
      %p102 = por %p100, %p101
      %p104 = scmp.ne.s32.totalorder %s87, %s103
      %p105 = scmp.eq.s32.totalorder %s41, 0
      %p106 = por %p104, %p105
      %s107 = ssub.s32 %s43, %s50
      %p108 = scmp.eq.s32.totalorder %s107, 0
      %s110 = sadd.s32 %s109, 1
      %s111 = scalar_select %p108, %s109, %s110
      %p114 = pneg %p108
      %p115 = scmp.eq.s32.totalorder %s35, 3
      %p116 = por %p114, %p115
      %p117 = scmp.ne.s32.totalorder %s109, %s112
      %p118 = scmp.eq.s32.totalorder %s35, 0
      %p119 = por %p117, %p118
      %p120 = scmp.ne.s32.totalorder %s109, %s112
      %p121 = scmp.eq.s32.totalorder %s40, 3
      %p122 = por %p120, %p121
      %p123 = scmp.ne.s32.totalorder %s112, %s113
      %p124 = scmp.eq.s32.totalorder %s40, 0
      %p125 = por %p123, %p124
      %p126 = scmp.ne.s32.totalorder %s112, %s113
      %p127 = scmp.eq.s32.totalorder %s41, 3
      %p128 = por %p126, %p127
      %p130 = scmp.ne.s32.totalorder %s113, %s129
      %p131 = scmp.eq.s32.totalorder %s41, 0
      %p132 = por %p130, %p131
      %s133 = ssub.s32 %s43, %s50
      %p134 = scmp.eq.s32.totalorder %s133, 0
      %s136 = sadd.s32 %s135, 1
      %s137 = scalar_select %p134, %s135, %s136
      %p140 = pneg %p134
      %p141 = scmp.eq.s32.totalorder %s35, 3
      %p142 = por %p140, %p141
      %p143 = scmp.ne.s32.totalorder %s135, %s138
      %p144 = scmp.eq.s32.totalorder %s35, 0
      %p145 = por %p143, %p144
      %p146 = scmp.ne.s32.totalorder %s135, %s138
      %p147 = scmp.eq.s32.totalorder %s40, 3
      %p148 = por %p146, %p147
      %p149 = scmp.ne.s32.totalorder %s138, %s139
      %p150 = scmp.eq.s32.totalorder %s40, 0
      %p151 = por %p149, %p150
      %p152 = scmp.ne.s32.totalorder %s138, %s139
      %p153 = scmp.eq.s32.totalorder %s41, 3
      %p154 = por %p152, %p153
      %p156 = scmp.ne.s32.totalorder %s139, %s155
      %p157 = scmp.eq.s32.totalorder %s41, 0
      %p158 = por %p156, %p157
      %s159 = ssub.s32 %s43, %s50
      %p160 = scmp.eq.s32.totalorder %s159, 0
      %s162 = sadd.s32 %s161, 1
      %s163 = scalar_select %p160, %s161, %s162
      %p166 = pneg %p160
      %p167 = scmp.eq.s32.totalorder %s35, 3
      %p168 = por %p166, %p167
      %p169 = scmp.ne.s32.totalorder %s161, %s164
      %p170 = scmp.eq.s32.totalorder %s35, 0
      %p171 = por %p169, %p170
      %p172 = scmp.ne.s32.totalorder %s161, %s164
      %p173 = scmp.eq.s32.totalorder %s40, 3
      %p174 = por %p172, %p173
      %p175 = scmp.ne.s32.totalorder %s164, %s165
      %p176 = scmp.eq.s32.totalorder %s40, 0
      %p177 = por %p175, %p176
      %p178 = scmp.ne.s32.totalorder %s164, %s165
      %p179 = scmp.eq.s32.totalorder %s41, 3
      %p180 = por %p178, %p179
      %p182 = scmp.ne.s32.totalorder %s165, %s181
      %p183 = scmp.eq.s32.totalorder %s41, 0
      %p184 = por %p182, %p183
      %s185 = ssub.s32 %s43, %s50
      %p186 = scmp.eq.s32.totalorder %s185, 0
      %s188 = sadd.s32 %s187, 1
      %s189 = scalar_select %p186, %s187, %s188
      %p192 = pneg %p186
      %p193 = scmp.eq.s32.totalorder %s35, 3
      %p194 = por %p192, %p193
      %p195 = scmp.ne.s32.totalorder %s187, %s190
      %p196 = scmp.eq.s32.totalorder %s35, 0
      %p197 = por %p195, %p196
      %p198 = scmp.ne.s32.totalorder %s187, %s190
      %p199 = scmp.eq.s32.totalorder %s40, 3
      %p200 = por %p198, %p199
      %p201 = scmp.ne.s32.totalorder %s190, %s191
      %p202 = scmp.eq.s32.totalorder %s40, 0
      %p203 = por %p201, %p202
      %p204 = scmp.ne.s32.totalorder %s190, %s191
      %p205 = scmp.eq.s32.totalorder %s41, 3
      %p206 = por %p204, %p205
      %p208 = scmp.ne.s32.totalorder %s191, %s207
      %p209 = scmp.eq.s32.totalorder %s41, 0
      %p210 = por %p208, %p209
      %s211 = ssub.s32 %s43, %s50
      %p212 = scmp.eq.s32.totalorder %s211, 0
      %s214 = sadd.s32 %s213, 1
      %s215 = scalar_select %p212, %s213, %s214
      %p218 = pneg %p212
      %p219 = scmp.eq.s32.totalorder %s35, 3
      %p220 = por %p218, %p219
      %p221 = scmp.ne.s32.totalorder %s213, %s216
      %p222 = scmp.eq.s32.totalorder %s35, 0
      %p223 = por %p221, %p222
      %p224 = scmp.ne.s32.totalorder %s213, %s216
      %p225 = scmp.eq.s32.totalorder %s40, 3
      %p226 = por %p224, %p225
      %p227 = scmp.ne.s32.totalorder %s216, %s217
      %p228 = scmp.eq.s32.totalorder %s40, 0
      %p229 = por %p227, %p228
      %p230 = scmp.ne.s32.totalorder %s216, %s217
      %p231 = scmp.eq.s32.totalorder %s41, 3
      %p232 = por %p230, %p231
      %p234 = scmp.ne.s32.totalorder %s217, %s233
      %p235 = scmp.eq.s32.totalorder %s41, 0
      %p236 = por %p234, %p235
      %s237 = ssub.s32 %s43, %s50
      %p238 = scmp.eq.s32.totalorder %s237, 0
      %s240 = sadd.s32 %s239, 1
      %s241 = scalar_select %p238, %s239, %s240
      %p244 = pneg %p238
      %p245 = scmp.eq.s32.totalorder %s35, 3
      %p246 = por %p244, %p245
      %p247 = scmp.ne.s32.totalorder %s239, %s242
      %p248 = scmp.eq.s32.totalorder %s35, 0
      %p249 = por %p247, %p248
      %p250 = scmp.ne.s32.totalorder %s239, %s242
      %p251 = scmp.eq.s32.totalorder %s40, 3
      %p252 = por %p250, %p251
      %p253 = scmp.ne.s32.totalorder %s242, %s243
      %p254 = scmp.eq.s32.totalorder %s40, 0
      %p255 = por %p253, %p254
      %p256 = scmp.ne.s32.totalorder %s242, %s243
      %p257 = scmp.eq.s32.totalorder %s41, 3
      %p258 = por %p256, %p257
      %p260 = scmp.ne.s32.totalorder %s243, %s259
      %p261 = scmp.eq.s32.totalorder %s41, 0
      %p262 = por %p260, %p261
      %s263 = ssub.s32 %s43, %s50
      %p264 = scmp.eq.s32.totalorder %s263, 0
      %s266 = sadd.s32 %s265, 1
      %s267 = scalar_select %p264, %s265, %s266
      %p270 = pneg %p264
      %p271 = scmp.eq.s32.totalorder %s35, 3
      %p272 = por %p270, %p271
      %p273 = scmp.ne.s32.totalorder %s265, %s268
      %p274 = scmp.eq.s32.totalorder %s35, 0
      %p275 = por %p273, %p274
      %p276 = scmp.ne.s32.totalorder %s265, %s268
      %p277 = scmp.eq.s32.totalorder %s40, 3
      %p278 = por %p276, %p277
      %p279 = scmp.ne.s32.totalorder %s268, %s269
      %p280 = scmp.eq.s32.totalorder %s40, 0
      %p281 = por %p279, %p280
      %p282 = scmp.ne.s32.totalorder %s268, %s269
      %p283 = scmp.eq.s32.totalorder %s41, 3
      %p284 = por %p282, %p283
      %p286 = scmp.ne.s32.totalorder %s269, %s285
      %p287 = scmp.eq.s32.totalorder %s41, 0
      %p288 = por %p286, %p287
      %s289 = ssub.s32 %s43, %s50
      %p290 = scmp.eq.s32.totalorder %s289, 0
      %s292 = sadd.s32 %s291, 1
      %s293 = scalar_select %p290, %s291, %s292
      %p296 = pneg %p290
      %p297 = scmp.eq.s32.totalorder %s35, 3
      %p298 = por %p296, %p297
      %p299 = scmp.ne.s32.totalorder %s291, %s294
      %p300 = scmp.eq.s32.totalorder %s35, 0
      %p301 = por %p299, %p300
      %p302 = scmp.ne.s32.totalorder %s291, %s294
      %p303 = scmp.eq.s32.totalorder %s40, 3
      %p304 = por %p302, %p303
      %p305 = scmp.ne.s32.totalorder %s294, %s295
      %p306 = scmp.eq.s32.totalorder %s40, 0
      %p307 = por %p305, %p306
      %p308 = scmp.ne.s32.totalorder %s294, %s295
      %p309 = scmp.eq.s32.totalorder %s41, 3
      %p310 = por %p308, %p309
      %p312 = scmp.ne.s32.totalorder %s295, %s311
      %p313 = scmp.eq.s32.totalorder %s41, 0
      %p314 = por %p312, %p313
      %s315 = ssub.s32 %s43, %s50
      %p316 = scmp.eq.s32.totalorder %s315, 0
      %s318 = sadd.s32 %s317, 1
      %s319 = scalar_select %p316, %s317, %s318
      %p322 = pneg %p316
      %p323 = scmp.eq.s32.totalorder %s35, 3
      %p324 = por %p322, %p323
      %p325 = scmp.ne.s32.totalorder %s317, %s320
      %p326 = scmp.eq.s32.totalorder %s35, 0
      %p327 = por %p325, %p326
      %p328 = scmp.ne.s32.totalorder %s317, %s320
      %p329 = scmp.eq.s32.totalorder %s40, 3
      %p330 = por %p328, %p329
      %p331 = scmp.ne.s32.totalorder %s320, %s321
      %p332 = scmp.eq.s32.totalorder %s40, 0
      %p333 = por %p331, %p332
      %p334 = scmp.ne.s32.totalorder %s320, %s321
      %p335 = scmp.eq.s32.totalorder %s41, 3
      %p336 = por %p334, %p335
      %p338 = scmp.ne.s32.totalorder %s321, %s337
      %p339 = scmp.eq.s32.totalorder %s41, 0
      %p340 = por %p338, %p339
      %s341 = ssub.s32 %s43, %s50
      %p342 = scmp.eq.s32.totalorder %s341, 0
      %s344 = sadd.s32 %s343, 1
      %s345 = scalar_select %p342, %s343, %s344
      %p348 = pneg %p342
      %p349 = scmp.eq.s32.totalorder %s35, 3
      %p350 = por %p348, %p349
      %p351 = scmp.ne.s32.totalorder %s343, %s346
      %p352 = scmp.eq.s32.totalorder %s35, 0
      %p353 = por %p351, %p352
      %p354 = scmp.ne.s32.totalorder %s343, %s346
      %p355 = scmp.eq.s32.totalorder %s40, 3
      %p356 = por %p354, %p355
      %p357 = scmp.ne.s32.totalorder %s346, %s347
      %p358 = scmp.eq.s32.totalorder %s40, 0
      %p359 = por %p357, %p358
      %p360 = scmp.ne.s32.totalorder %s346, %s347
      %p361 = scmp.eq.s32.totalorder %s41, 3
      %p362 = por %p360, %p361
      %p364 = scmp.ne.s32.totalorder %s347, %s363
      %p365 = scmp.eq.s32.totalorder %s41, 0
      %p366 = por %p364, %p365
      %s367 = ssub.s32 %s43, %s50
      %p368 = scmp.eq.s32.totalorder %s367, 0
      %s370 = sadd.s32 %s369, 1
      %s371 = scalar_select %p368, %s369, %s370
      %p374 = pneg %p368
      %p375 = scmp.eq.s32.totalorder %s35, 3
      %p376 = por %p374, %p375
      %p377 = scmp.ne.s32.totalorder %s369, %s372
      %p378 = scmp.eq.s32.totalorder %s35, 0
      %p379 = por %p377, %p378
      %p380 = scmp.ne.s32.totalorder %s369, %s372
      %p381 = scmp.eq.s32.totalorder %s40, 3
      %p382 = por %p380, %p381
      %p383 = scmp.ne.s32.totalorder %s372, %s373
      %p384 = scmp.eq.s32.totalorder %s40, 0
      %p385 = por %p383, %p384
      %p386 = scmp.ne.s32.totalorder %s372, %s373
      %p387 = scmp.eq.s32.totalorder %s41, 3
      %p388 = por %p386, %p387
      %p390 = scmp.ne.s32.totalorder %s373, %s389
      %p391 = scmp.eq.s32.totalorder %s41, 0
      %p392 = por %p390, %p391
      %s393 = ssub.s32 %s43, %s50
      %p394 = scmp.eq.s32.totalorder %s393, 0
      %s396 = sadd.s32 %s395, 1
      %s397 = scalar_select %p394, %s395, %s396
      %p400 = pneg %p394
      %p401 = scmp.eq.s32.totalorder %s35, 3
      %p402 = por %p400, %p401
      %p403 = scmp.ne.s32.totalorder %s395, %s398
      %p404 = scmp.eq.s32.totalorder %s35, 0
      %p405 = por %p403, %p404
      %p406 = scmp.ne.s32.totalorder %s395, %s398
      %p407 = scmp.eq.s32.totalorder %s40, 3
      %p408 = por %p406, %p407
      %p409 = scmp.ne.s32.totalorder %s398, %s399
      %p410 = scmp.eq.s32.totalorder %s40, 0
      %p411 = por %p409, %p410
      %p412 = scmp.ne.s32.totalorder %s398, %s399
      %p413 = scmp.eq.s32.totalorder %s41, 3
      %p414 = por %p412, %p413
      %p416 = scmp.ne.s32.totalorder %s399, %s415
      %p417 = scmp.eq.s32.totalorder %s41, 0
      %p418 = por %p416, %p417
      %s419 = ssub.s32 %s42, %s54
      %p420 = scmp.eq.s32.totalorder %s419, 0
      %s422 = sadd.s32 %s421, 1
      %s423 = scalar_select %p420, %s421, %s422
      %p426 = pneg %p420
      %p427 = scmp.eq.s32.totalorder %s35, 3
      %p428 = por %p426, %p427
      %p429 = scmp.ne.s32.totalorder %s421, %s424
      %p430 = scmp.eq.s32.totalorder %s35, 0
      %p431 = por %p429, %p430
      %p432 = scmp.ne.s32.totalorder %s421, %s424
      %p433 = scmp.eq.s32.totalorder %s40, 3
      %p434 = por %p432, %p433
      %p435 = scmp.ne.s32.totalorder %s424, %s425
      %p436 = scmp.eq.s32.totalorder %s40, 0
      %p437 = por %p435, %p436
      %p438 = scmp.ne.s32.totalorder %s424, %s425
      %p439 = scmp.eq.s32.totalorder %s41, 3
      %p440 = por %p438, %p439
      %p442 = scmp.ne.s32.totalorder %s425, %s441
      %p443 = scmp.eq.s32.totalorder %s41, 0
      %p444 = por %p442, %p443
      %p445 = scmp.le.s32.totalorder 1, %s35
      %p446 = scmp.lt.s32.totalorder %s35, 5
      %p447 = pnand %p445, %p446
      %p448 = pneg %p447
      // Predicated region
      $region9: #{tpu_custom_call.1} parent=5 // pred_check
        _
      $region10: #{tpu_custom_call.1} parent=5 // pred_check_branch
        %450 = sbr.rel (%p447) target = $region12
      $region11: #{tpu_custom_call.1} parent=5 // pred_region
        %s451 = ssub.s32 %s35, 1
      $region12: #{tpu_custom_call.1} parent=5 // pred_fallthru
        _
      %p452 = scmp.lt.s32.totalorder %s35, 4
      // Predicated region
      $region13: #{tpu_custom_call.1} parent=5 // pred_check
        %p453 = pneg %p452
      $region14: #{tpu_custom_call.1} parent=5 // pred_check_branch
        %455 = sbr.rel (%p453) target = $region16
      $region15: #{tpu_custom_call.1} parent=5 // pred_region
        // Predicated region
        $region17: #{tpu_custom_call.1} parent=15 // pred_check
          %p456 = pneg %p67
        $region18: #{tpu_custom_call.1} parent=15 // pred_check_branch
          %458 = sbr.rel (%p456) target = $region20
        $region19: #{tpu_custom_call.1} parent=15 // pred_region
          %s459 = sand.u32 %s57, 1
          %s460 = scalar_lea.sflag [#allocation3], %s459
          %s461 = sand.u32 %s57, 1
          %s462 = smul.addr %s461, 8
          %s463 = scalar_lea.vmem [#allocation2], %s462
          %s465 = ssub.s32 128, 128
          %466 = vsyncadd %s460, %s465
          %s467 = smul.addr %s42, 128
          %s468 = scalar_lea.hbm %s0, %s467
          %s470 = sshll.u32 %s463, 4
          %s471 = int_to_ptr.vmem [resolvable:$true] %s470
          %473 = dma.hbm_to_vmem [thread:$0]  %s468, 128, %s471, %s460
        $region20: #{tpu_custom_call.1} parent=15 // pred_fallthru
          _
        // Predicated region
        $region21: #{tpu_custom_call.1} parent=15 // pred_check
          %p474 = pneg %p93
        $region22: #{tpu_custom_call.1} parent=15 // pred_check_branch
          %476 = sbr.rel (%p474) target = $region24
        $region23: #{tpu_custom_call.1} parent=15 // pred_region
          %s477 = sand.u32 %s35, 1
          %s478 = scalar_lea.sflag [#allocation6], %s477
          %s479 = sand.u32 %s83, 1
          %s480 = smul.addr %s479, 8
          %s481 = scalar_lea.vmem [#allocation5], %s480
          %s483 = ssub.s32 128, 128
          %484 = vsyncadd %s478, %s483
          %s485 = smul.addr %s42, 128
          %s486 = scalar_lea.hbm %s1, %s485
          %s488 = sshll.u32 %s481, 4
          %s489 = int_to_ptr.vmem [resolvable:$true] %s488
          %491 = dma.hbm_to_vmem [thread:$0]  %s486, 128, %s489, %s478
        $region24: #{tpu_custom_call.1} parent=15 // pred_fallthru
          _
        // Predicated region
        $region25: #{tpu_custom_call.1} parent=15 // pred_check
          %p492 = pneg %p119
        $region26: #{tpu_custom_call.1} parent=15 // pred_check_branch
          %494 = sbr.rel (%p492) target = $region28
        $region27: #{tpu_custom_call.1} parent=15 // pred_region
          %p495 = scmp.lt.s32.totalorder %s43, 1
          %s496 = scalar_select %p495, %s43, 1
          %s497 = scalar_lea.vmem %s2, %s496
        $region28: #{tpu_custom_call.1} parent=15 // pred_fallthru
          _
        // Predicated region
        $region29: #{tpu_custom_call.1} parent=15 // pred_check
          %p498 = pneg %p145
        $region30: #{tpu_custom_call.1} parent=15 // pred_check_branch
          %500 = sbr.rel (%p498) target = $region32
        $region31: #{tpu_custom_call.1} parent=15 // pred_region
          %p501 = scmp.lt.s32.totalorder %s43, 1
          %s502 = scalar_select %p501, %s43, 1
          %s503 = scalar_lea.vmem %s3, %s502
        $region32: #{tpu_custom_call.1} parent=15 // pred_fallthru
          _
        // Predicated region
        $region33: #{tpu_custom_call.1} parent=15 // pred_check
          %p504 = pneg %p171
        $region34: #{tpu_custom_call.1} parent=15 // pred_check_branch
          %506 = sbr.rel (%p504) target = $region36
        $region35: #{tpu_custom_call.1} parent=15 // pred_region
          %s507 = sand.u32 %s35, 1
          %s508 = scalar_lea.sflag [#allocation6], %s507
          %s509 = sand.u32 %s161, 1
          %s510 = smul.addr %s509, 768
          %s511 = scalar_lea.vmem [#allocation7], %s510
          %s513 = ssub.s32 12288, 12288
          %514 = vsyncadd %s508, %s513
          %s515 = smul.addr %s43, 96
          %s516 = smul.addr %s515, 128
          %s517 = scalar_lea.hbm %s4, %s516
          %s518 = sshll.u32 %s511, 4
          %s519 = int_to_ptr.vmem [resolvable:$true] %s518
          %524 = dma.hbm_to_vmem [thread:$0]  %s517, 12288, %s519, %s508, 768, 768, 48
        $region36: #{tpu_custom_call.1} parent=15 // pred_fallthru
          _
        // Predicated region
        $region37: #{tpu_custom_call.1} parent=15 // pred_check
          %p525 = pneg %p197
        $region38: #{tpu_custom_call.1} parent=15 // pred_check_branch
          %527 = sbr.rel (%p525) target = $region40
        $region39: #{tpu_custom_call.1} parent=15 // pred_region
          %p528 = scmp.lt.s32.totalorder %s43, 1
          %s529 = scalar_select %p528, %s43, 1
          %s530 = smul.addr %s529, 6
          %s531 = scalar_lea.vmem %s5, %s530
        $region40: #{tpu_custom_call.1} parent=15 // pred_fallthru
          _
        // Predicated region
        $region41: #{tpu_custom_call.1} parent=15 // pred_check
          %p532 = pneg %p223
        $region42: #{tpu_custom_call.1} parent=15 // pred_check_branch
          %534 = sbr.rel (%p532) target = $region44
        $region43: #{tpu_custom_call.1} parent=15 // pred_region
          %s535 = sand.u32 %s35, 1
          %s536 = scalar_lea.sflag [#allocation9], %s535
          %s537 = sand.u32 %s213, 1
          %s538 = smul.addr %s537, 256
          %s539 = scalar_lea.vmem [#allocation8], %s538
          %s541 = ssub.s32 4096, 4096
          %542 = vsyncadd %s536, %s541
          %s543 = smul.addr %s43, 32
          %s544 = smul.addr %s543, 128
          %s545 = scalar_lea.hbm %s6, %s544
          %s546 = sshll.u32 %s539, 4
          %s547 = int_to_ptr.vmem [resolvable:$true] %s546
          %552 = dma.hbm_to_vmem [thread:$0]  %s545, 4096, %s547, %s536, 128, 128, 8
        $region44: #{tpu_custom_call.1} parent=15 // pred_fallthru
          _
        // Predicated region
        $region45: #{tpu_custom_call.1} parent=15 // pred_check
          %p553 = pneg %p249
        $region46: #{tpu_custom_call.1} parent=15 // pred_check_branch
          %555 = sbr.rel (%p553) target = $region48
        $region47: #{tpu_custom_call.1} parent=15 // pred_region
          %p556 = scmp.lt.s32.totalorder %s43, 1
          %s557 = scalar_select %p556, %s43, 1
          %s558 = scalar_lea.vmem %s7, %s557
        $region48: #{tpu_custom_call.1} parent=15 // pred_fallthru
          _
        // Predicated region
        $region49: #{tpu_custom_call.1} parent=15 // pred_check
          %p559 = pneg %p275
        $region50: #{tpu_custom_call.1} parent=15 // pred_check_branch
          %561 = sbr.rel (%p559) target = $region52
        $region51: #{tpu_custom_call.1} parent=15 // pred_region
          %p562 = scmp.lt.s32.totalorder %s43, 1
          %s563 = scalar_select %p562, %s43, 1
          %s564 = scalar_lea.vmem %s8, %s563
        $region52: #{tpu_custom_call.1} parent=15 // pred_fallthru
          _
        // Predicated region
        $region53: #{tpu_custom_call.1} parent=15 // pred_check
          %p565 = pneg %p301
        $region54: #{tpu_custom_call.1} parent=15 // pred_check_branch
          %567 = sbr.rel (%p565) target = $region56
        $region55: #{tpu_custom_call.1} parent=15 // pred_region
          %p568 = scmp.lt.s32.totalorder %s43, 1
          %s569 = scalar_select %p568, %s43, 1
          %s570 = scalar_lea.vmem %s9, %s569
        $region56: #{tpu_custom_call.1} parent=15 // pred_fallthru
          _
        // Predicated region
        $region57: #{tpu_custom_call.1} parent=15 // pred_check
          %p571 = pneg %p327
        $region58: #{tpu_custom_call.1} parent=15 // pred_check_branch
          %573 = sbr.rel (%p571) target = $region60
        $region59: #{tpu_custom_call.1} parent=15 // pred_region
          %s574 = sand.u32 %s35, 1
          %s575 = scalar_lea.sflag [#allocation9], %s574
          %s576 = sand.u32 %s317, 1
          %s577 = smul.addr %s576, 128
          %s578 = scalar_lea.vmem [#allocation10], %s577
          %s580 = ssub.s32 2048, 2048
          %581 = vsyncadd %s575, %s580
          %s582 = smul.addr %s43, 16
          %s583 = smul.addr %s582, 128
          %s584 = scalar_lea.hbm %s10, %s583
          %s585 = sshll.u32 %s578, 4
          %s586 = int_to_ptr.vmem [resolvable:$true] %s585
          %591 = dma.hbm_to_vmem [thread:$0]  %s584, 2048, %s586, %s575, 128, 128, 8
        $region60: #{tpu_custom_call.1} parent=15 // pred_fallthru
          _
        // Predicated region
        $region61: #{tpu_custom_call.1} parent=15 // pred_check
          %p592 = pneg %p353
        $region62: #{tpu_custom_call.1} parent=15 // pred_check_branch
          %594 = sbr.rel (%p592) target = $region64
        $region63: #{tpu_custom_call.1} parent=15 // pred_region
          %p595 = scmp.lt.s32.totalorder %s43, 1
          %s596 = scalar_select %p595, %s43, 1
          %s597 = scalar_lea.vmem %s11, %s596
        $region64: #{tpu_custom_call.1} parent=15 // pred_fallthru
          _
        // Predicated region
        $region65: #{tpu_custom_call.1} parent=15 // pred_check
          %p598 = pneg %p379
        $region66: #{tpu_custom_call.1} parent=15 // pred_check_branch
          %600 = sbr.rel (%p598) target = $region68
        $region67: #{tpu_custom_call.1} parent=15 // pred_region
          %s601 = sand.u32 %s369, 1
          %s602 = scalar_lea.sflag [#allocation12], %s601
          %s603 = sand.u32 %s369, 1
          %s604 = smul.addr %s603, 128
          %s605 = scalar_lea.vmem [#allocation11], %s604
          %s607 = ssub.s32 2048, 2048
          %608 = vsyncadd %s602, %s607
          %s609 = smul.addr %s43, 16
          %s610 = smul.addr %s609, 128
          %s611 = scalar_lea.hbm %s12, %s610
          %s612 = sshll.u32 %s605, 4
          %s613 = int_to_ptr.vmem [resolvable:$true] %s612
          %618 = dma.hbm_to_vmem [thread:$0]  %s611, 2048, %s613, %s602, 128, 128, 8
        $region68: #{tpu_custom_call.1} parent=15 // pred_fallthru
          _
        // Predicated region
        $region69: #{tpu_custom_call.1} parent=15 // pred_check
          %p619 = pneg %p405
        $region70: #{tpu_custom_call.1} parent=15 // pred_check_branch
          %621 = sbr.rel (%p619) target = $region72
        $region71: #{tpu_custom_call.1} parent=15 // pred_region
          %p622 = scmp.lt.s32.totalorder %s43, 1
          %s623 = scalar_select %p622, %s43, 1
          %s624 = scalar_lea.vmem %s13, %s623
        $region72: #{tpu_custom_call.1} parent=15 // pred_fallthru
          _
      $region16: #{tpu_custom_call.1} parent=5 // pred_fallthru
        _
      %p625 = scmp.le.s32.totalorder 1, %s35
      %p626 = scmp.lt.s32.totalorder %s35, 5
      %p627 = pnand %p625, %p626
      %p628 = pneg %p627
      // Predicated region
      $region73: #{tpu_custom_call.1} parent=5 // pred_check
        _
      $region74: #{tpu_custom_call.1} parent=5 // pred_check_branch
        %630 = sbr.rel (%p627) target = $region76
      $region75: #{tpu_custom_call.1} parent=5 // pred_region
        %s631 = ssub.s32 %s35, 1
        %s632 = sand.u32 %s60, 1
        %s633 = scalar_lea.sflag [#allocation3], %s632
        %s634 = sand.u32 %s60, 1
        %s635 = smul.addr %s634, 8
        %s636 = scalar_lea.vmem [#allocation2], %s635
        // Predicated region
        $region77: #{tpu_custom_call.1} parent=75 // pred_check
          %p637 = pneg %p73
        $region78: #{tpu_custom_call.1} parent=75 // pred_check_branch
          %639 = sbr.rel (%p637) target = $region80
        $region79: #{tpu_custom_call.1} parent=75 // pred_region
          %640 = dma.done %s633, 128
        $region80: #{tpu_custom_call.1} parent=75 // pred_fallthru
          _
        %s641 = sand.u32 %s40, 1
        %s642 = scalar_lea.sflag [#allocation6], %s641
        %s643 = sand.u32 %s86, 1
        %s644 = smul.addr %s643, 8
        %s645 = scalar_lea.vmem [#allocation5], %s644
        // Predicated region
        $region81: #{tpu_custom_call.1} parent=75 // pred_check
          %p646 = pneg %p99
        $region82: #{tpu_custom_call.1} parent=75 // pred_check_branch
          %648 = sbr.rel (%p646) target = $region84
        $region83: #{tpu_custom_call.1} parent=75 // pred_region
          %649 = dma.done %s642, 128
        $region84: #{tpu_custom_call.1} parent=75 // pred_fallthru
          _
        %s650 = sand.u32 %s40, 1
        %s651 = scalar_lea.sflag [#allocation6], %s650
        %s652 = sand.u32 %s164, 1
        %s653 = smul.addr %s652, 768
        %s654 = scalar_lea.vmem [#allocation7], %s653
        // Predicated region
        $region85: #{tpu_custom_call.1} parent=75 // pred_check
          %p655 = pneg %p177
        $region86: #{tpu_custom_call.1} parent=75 // pred_check_branch
          %657 = sbr.rel (%p655) target = $region88
        $region87: #{tpu_custom_call.1} parent=75 // pred_region
          %658 = dma.done %s651, 12288
        $region88: #{tpu_custom_call.1} parent=75 // pred_fallthru
          _
        %s659 = sand.u32 %s40, 1
        %s660 = scalar_lea.sflag [#allocation9], %s659
        %s661 = sand.u32 %s216, 1
        %s662 = smul.addr %s661, 256
        %s663 = scalar_lea.vmem [#allocation8], %s662
        // Predicated region
        $region89: #{tpu_custom_call.1} parent=75 // pred_check
          %p664 = pneg %p229
        $region90: #{tpu_custom_call.1} parent=75 // pred_check_branch
          %666 = sbr.rel (%p664) target = $region92
        $region91: #{tpu_custom_call.1} parent=75 // pred_region
          %667 = dma.done %s660, 4096
        $region92: #{tpu_custom_call.1} parent=75 // pred_fallthru
          _
        %s668 = sand.u32 %s40, 1
        %s669 = scalar_lea.sflag [#allocation9], %s668
        %s670 = sand.u32 %s320, 1
        %s671 = smul.addr %s670, 128
        %s672 = scalar_lea.vmem [#allocation10], %s671
        // Predicated region
        $region93: #{tpu_custom_call.1} parent=75 // pred_check
          %p673 = pneg %p333
        $region94: #{tpu_custom_call.1} parent=75 // pred_check_branch
          %675 = sbr.rel (%p673) target = $region96
        $region95: #{tpu_custom_call.1} parent=75 // pred_region
          %676 = dma.done %s669, 2048
        $region96: #{tpu_custom_call.1} parent=75 // pred_fallthru
          _
        %s677 = sand.u32 %s372, 1
        %s678 = scalar_lea.sflag [#allocation12], %s677
        %s679 = sand.u32 %s372, 1
        %s680 = smul.addr %s679, 128
        %s681 = scalar_lea.vmem [#allocation11], %s680
        // Predicated region
        $region97: #{tpu_custom_call.1} parent=75 // pred_check
          %p682 = pneg %p385
        $region98: #{tpu_custom_call.1} parent=75 // pred_check_branch
          %684 = sbr.rel (%p682) target = $region100
        $region99: #{tpu_custom_call.1} parent=75 // pred_region
          %685 = dma.done %s678, 2048
        $region100: #{tpu_custom_call.1} parent=75 // pred_fallthru
          _
        %s686 = sand.u32 %s60, 1
        %s687 = scalar_lea.sflag [#allocation3], %s686
        %s688 = sand.u32 %s60, 1
        %s689 = smul.addr %s688, 8
        %s690 = scalar_lea.vmem [#allocation2], %s689
        %p691 = pneg %p73
        %p692 = pneg %p70
        %s693 = sand.u32 %s40, 1
        %s694 = scalar_lea.sflag [#allocation6], %s693
        %s695 = sand.u32 %s86, 1
        %s696 = smul.addr %s695, 8
        %s697 = scalar_lea.vmem [#allocation5], %s696
        %p698 = pneg %p99
        %p699 = pneg %p96
        %p700 = scmp.lt.s32.totalorder %s45, 1
        %s701 = scalar_select %p700, %s45, 1
        %s702 = scalar_lea.vmem %s2, %s701
        %p703 = pneg %p125
        %p704 = pneg %p122
        %p705 = scmp.lt.s32.totalorder %s45, 1
        %s706 = scalar_select %p705, %s45, 1
        %s707 = scalar_lea.vmem %s3, %s706
        %p708 = pneg %p151
        %p709 = pneg %p148
        %s710 = sand.u32 %s40, 1
        %s711 = scalar_lea.sflag [#allocation6], %s710
        %s712 = sand.u32 %s164, 1
        %s713 = smul.addr %s712, 768
        %s714 = scalar_lea.vmem [#allocation7], %s713
        %p715 = pneg %p177
        %p716 = pneg %p174
        %p717 = scmp.lt.s32.totalorder %s45, 1
        %s718 = scalar_select %p717, %s45, 1
        %s719 = smul.addr %s718, 6
        %s720 = scalar_lea.vmem %s5, %s719
        %p721 = pneg %p203
        %p722 = pneg %p200
        %s723 = sand.u32 %s40, 1
        %s724 = scalar_lea.sflag [#allocation9], %s723
        %s725 = sand.u32 %s216, 1
        %s726 = smul.addr %s725, 256
        %s727 = scalar_lea.vmem [#allocation8], %s726
        %p728 = pneg %p229
        %p729 = pneg %p226
        %p730 = scmp.lt.s32.totalorder %s45, 1
        %s731 = scalar_select %p730, %s45, 1
        %s732 = scalar_lea.vmem %s7, %s731
        %p733 = pneg %p255
        %p734 = pneg %p252
        %p735 = scmp.lt.s32.totalorder %s45, 1
        %s736 = scalar_select %p735, %s45, 1
        %s737 = scalar_lea.vmem %s8, %s736
        %p738 = pneg %p281
        %p739 = pneg %p278
        %p740 = scmp.lt.s32.totalorder %s45, 1
        %s741 = scalar_select %p740, %s45, 1
        %s742 = scalar_lea.vmem %s9, %s741
        %p743 = pneg %p307
        %p744 = pneg %p304
        %s745 = sand.u32 %s40, 1
        %s746 = scalar_lea.sflag [#allocation9], %s745
        %s747 = sand.u32 %s320, 1
        %s748 = smul.addr %s747, 128
        %s749 = scalar_lea.vmem [#allocation10], %s748
        %p750 = pneg %p333
        %p751 = pneg %p330
        %p752 = scmp.lt.s32.totalorder %s45, 1
        %s753 = scalar_select %p752, %s45, 1
        %s754 = scalar_lea.vmem %s11, %s753
        %p755 = pneg %p359
        %p756 = pneg %p356
        %s757 = sand.u32 %s372, 1
        %s758 = scalar_lea.sflag [#allocation12], %s757
        %s759 = sand.u32 %s372, 1
        %s760 = smul.addr %s759, 128
        %s761 = scalar_lea.vmem [#allocation11], %s760
        %p762 = pneg %p385
        %p763 = pneg %p382
        %p764 = scmp.lt.s32.totalorder %s45, 1
        %s765 = scalar_select %p764, %s45, 1
        %s766 = scalar_lea.vmem %s13, %s765
        %p767 = pneg %p411
        %p768 = pneg %p408
        %p769 = pneg %p437
        %p770 = pneg %p434
        %s771 = sand.u32 %s424, 1
        %s772 = scalar_lea.sflag [#allocation4], %s771
        %s773 = sand.u32 %s424, 1
        %s774 = smul.addr %s773, 8
        %s775 = scalar_lea.vmem [#allocation13], %s774
        %p776 = scmp.lt.s32.totalorder %s45, 1
        %s777 = scalar_select %p776, %s45, 1
        %s778 = scalar_lea.vmem %s2, %s777
        %p779 = scmp.lt.s32.totalorder %s45, 1
        %s780 = scalar_select %p779, %s45, 1
        %s781 = scalar_lea.vmem %s3, %s780
        %p782 = scmp.lt.s32.totalorder %s45, 1
        %s783 = scalar_select %p782, %s45, 1
        %s784 = smul.addr %s783, 6
        %s785 = scalar_lea.vmem %s5, %s784
        %p786 = scmp.lt.s32.totalorder %s45, 1
        %s787 = scalar_select %p786, %s45, 1
        %s788 = scalar_lea.vmem %s7, %s787
        %p789 = scmp.lt.s32.totalorder %s45, 1
        %s790 = scalar_select %p789, %s45, 1
        %s791 = scalar_lea.vmem %s8, %s790
        %p792 = scmp.lt.s32.totalorder %s45, 1
        %s793 = scalar_select %p792, %s45, 1
        %s794 = scalar_lea.vmem %s9, %s793
        %p795 = scmp.lt.s32.totalorder %s45, 1
        %s796 = scalar_select %p795, %s45, 1
        %s797 = scalar_lea.vmem %s11, %s796
        %p798 = scmp.lt.s32.totalorder %s45, 1
        %s799 = scalar_select %p798, %s45, 1
        %s800 = scalar_lea.vmem %s13, %s799
        %p801 = scmp.eq.s32.totalorder %s45, 0
        // Predicated region
        $region101: #{tpu_custom_call.1} parent=75 // pred_check
          %p802 = pneg %p801
        $region102: #{tpu_custom_call.1} parent=75 // pred_check_branch
          %804 = sbr.rel (%p802) target = $region104
        $region103: #{tpu_custom_call.1} parent=75 // pred_region
          %v805 = vld [vmem:[%s636] sm:$0xff]
          %806 = vst [vmem:[%s775] sm:$0xff] %v805
        $region104: #{tpu_custom_call.1} parent=75 // pred_fallthru
          _
        %v807 = vld [vmem:[%s775] sm:$0xff]
        %v808 = vld [vmem:[%s645] sm:$0xff]
        %vm809 = vcmp.gt.f32.partialorder %v808, 0.0
        %v810 = vlaneseq
        %v811 = vand.u32 %v810, 127
        %vm812 = vcmp.lt.s32.totalorder %v811, 32
        %v813 = vsel %vm812, 1, 0
        %v814 = vcvt.s32.f32 %v813
        %v815 = vld [vmem:[%s778] sm:$0x1]
        %v816 = vld [vmem:[%s781] sm:$0x1]
        %817 = vadd.xlane.f32.xlu0 %v807
        %v818 = vpop.xlane.xlu0 %817
        %v819 = vmul.f32 %v818, 0.03125
        %v820 = vsub.f32 %v807, %v819
        %v821 = vmul.f32 %v820, %v814
        %v822 = vmul.f32 %v821, %v821
        %823 = vadd.xlane.f32.xlu0 %v822
        %v824 = vpop.xlane.xlu0 %823
        %v825 = vmul.f32 %v824, 0.03125
        %v826 = vadd.f32 %v825, 1e-05
        %v827 = vrsqrt.pop %v826
        %v828 = vmul.f32 %v821, %v827
        %v830 = vlaneseq
        %v831 = vshrl.u32 %v830, 7
        %v832 = vsub.s32 0, %v831
        %v833 = vrot.slane %v815, %v832
        %v835 = vmul.f32 %v828, %v833
        %v837 = vlaneseq
        %v838 = vshrl.u32 %v837, 7
        %v839 = vsub.s32 0, %v838
        %v840 = vrot.slane %v816, %v839
        %v842 = vadd.f32 %v835, %v840
        %v843 = vld [vmem:[%s654] sm:$0xff]
        %v844 = vld [vmem:[%s654 + $0x8] sm:$0xff]
        %v845 = vld [vmem:[%s654 + $0x10] sm:$0xff]
        %v846 = vld [vmem:[%s654 + $0x18] sm:$0xff]
        %v847 = vld [vmem:[%s654 + $0x20] sm:$0xff]
        %v848 = vld [vmem:[%s654 + $0x28] sm:$0xff]
        %v849 = vld [vmem:[%s654 + $0x30] sm:$0xff]
        %v850 = vld [vmem:[%s654 + $0x38] sm:$0xff]
        %v851 = vld [vmem:[%s654 + $0x40] sm:$0xff]
        %v852 = vld [vmem:[%s654 + $0x48] sm:$0xff]
        %v853 = vld [vmem:[%s654 + $0x50] sm:$0xff]
        %v854 = vld [vmem:[%s654 + $0x58] sm:$0xff]
        %v855 = vld [vmem:[%s654 + $0x60] sm:$0xff]
        %v856 = vld [vmem:[%s654 + $0x68] sm:$0xff]
        %v857 = vld [vmem:[%s654 + $0x70] sm:$0xff]
        %v858 = vld [vmem:[%s654 + $0x78] sm:$0xff]
        %v859 = vld [vmem:[%s654 + $0x80] sm:$0xff]
        %v860 = vld [vmem:[%s654 + $0x88] sm:$0xff]
        %v861 = vld [vmem:[%s654 + $0x90] sm:$0xff]
        %v862 = vld [vmem:[%s654 + $0x98] sm:$0xff]
        %v863 = vld [vmem:[%s654 + $0xa0] sm:$0xff]
        %v864 = vld [vmem:[%s654 + $0xa8] sm:$0xff]
        %v865 = vld [vmem:[%s654 + $0xb0] sm:$0xff]
        %v866 = vld [vmem:[%s654 + $0xb8] sm:$0xff]
        %v867 = vld [vmem:[%s654 + $0xc0] sm:$0xff]
        %v868 = vld [vmem:[%s654 + $0xc8] sm:$0xff]
        %v869 = vld [vmem:[%s654 + $0xd0] sm:$0xff]
        %v870 = vld [vmem:[%s654 + $0xd8] sm:$0xff]
        %v871 = vld [vmem:[%s654 + $0xe0] sm:$0xff]
        %v872 = vld [vmem:[%s654 + $0xe8] sm:$0xff]
        %v873 = vld [vmem:[%s654 + $0xf0] sm:$0xff]
        %v874 = vld [vmem:[%s654 + $0xf8] sm:$0xff]
        %v875 = vld [vmem:[%s654 + $0x100] sm:$0xff]
        %v876 = vld [vmem:[%s654 + $0x108] sm:$0xff]
        %v877 = vld [vmem:[%s654 + $0x110] sm:$0xff]
        %v878 = vld [vmem:[%s654 + $0x118] sm:$0xff]
        %v879 = vld [vmem:[%s654 + $0x120] sm:$0xff]
        %v880 = vld [vmem:[%s654 + $0x128] sm:$0xff]
        %v881 = vld [vmem:[%s654 + $0x130] sm:$0xff]
        %v882 = vld [vmem:[%s654 + $0x138] sm:$0xff]
        %v883 = vld [vmem:[%s654 + $0x140] sm:$0xff]
        %v884 = vld [vmem:[%s654 + $0x148] sm:$0xff]
        %v885 = vld [vmem:[%s654 + $0x150] sm:$0xff]
        %v886 = vld [vmem:[%s654 + $0x158] sm:$0xff]
        %v887 = vld [vmem:[%s654 + $0x160] sm:$0xff]
        %v888 = vld [vmem:[%s654 + $0x168] sm:$0xff]
        %v889 = vld [vmem:[%s654 + $0x170] sm:$0xff]
        %v890 = vld [vmem:[%s654 + $0x178] sm:$0xff]
        %v891 = vld [vmem:[%s654 + $0x180] sm:$0xff]
        %v892 = vld [vmem:[%s654 + $0x188] sm:$0xff]
        %v893 = vld [vmem:[%s654 + $0x190] sm:$0xff]
        %v894 = vld [vmem:[%s654 + $0x198] sm:$0xff]
        %v895 = vld [vmem:[%s654 + $0x1a0] sm:$0xff]
        %v896 = vld [vmem:[%s654 + $0x1a8] sm:$0xff]
        %v897 = vld [vmem:[%s654 + $0x1b0] sm:$0xff]
        %v898 = vld [vmem:[%s654 + $0x1b8] sm:$0xff]
        %v899 = vld [vmem:[%s654 + $0x1c0] sm:$0xff]
        %v900 = vld [vmem:[%s654 + $0x1c8] sm:$0xff]
        %v901 = vld [vmem:[%s654 + $0x1d0] sm:$0xff]
        %v902 = vld [vmem:[%s654 + $0x1d8] sm:$0xff]
        %v903 = vld [vmem:[%s654 + $0x1e0] sm:$0xff]
        %v904 = vld [vmem:[%s654 + $0x1e8] sm:$0xff]
        %v905 = vld [vmem:[%s654 + $0x1f0] sm:$0xff]
        %v906 = vld [vmem:[%s654 + $0x1f8] sm:$0xff]
        %v907 = vld [vmem:[%s654 + $0x200] sm:$0xff]
        %v908 = vld [vmem:[%s654 + $0x208] sm:$0xff]
        %v909 = vld [vmem:[%s654 + $0x210] sm:$0xff]
        %v910 = vld [vmem:[%s654 + $0x218] sm:$0xff]
        %v911 = vld [vmem:[%s654 + $0x220] sm:$0xff]
        %v912 = vld [vmem:[%s654 + $0x228] sm:$0xff]
        %v913 = vld [vmem:[%s654 + $0x230] sm:$0xff]
        %v914 = vld [vmem:[%s654 + $0x238] sm:$0xff]
        %v915 = vld [vmem:[%s654 + $0x240] sm:$0xff]
        %v916 = vld [vmem:[%s654 + $0x248] sm:$0xff]
        %v917 = vld [vmem:[%s654 + $0x250] sm:$0xff]
        %v918 = vld [vmem:[%s654 + $0x258] sm:$0xff]
        %v919 = vld [vmem:[%s654 + $0x260] sm:$0xff]
        %v920 = vld [vmem:[%s654 + $0x268] sm:$0xff]
        %v921 = vld [vmem:[%s654 + $0x270] sm:$0xff]
        %v922 = vld [vmem:[%s654 + $0x278] sm:$0xff]
        %v923 = vld [vmem:[%s654 + $0x280] sm:$0xff]
        %v924 = vld [vmem:[%s654 + $0x288] sm:$0xff]
        %v925 = vld [vmem:[%s654 + $0x290] sm:$0xff]
        %v926 = vld [vmem:[%s654 + $0x298] sm:$0xff]
        %v927 = vld [vmem:[%s654 + $0x2a0] sm:$0xff]
        %v928 = vld [vmem:[%s654 + $0x2a8] sm:$0xff]
        %v929 = vld [vmem:[%s654 + $0x2b0] sm:$0xff]
        %v930 = vld [vmem:[%s654 + $0x2b8] sm:$0xff]
        %v931 = vld [vmem:[%s654 + $0x2c0] sm:$0xff]
        %v932 = vld [vmem:[%s654 + $0x2c8] sm:$0xff]
        %v933 = vld [vmem:[%s654 + $0x2d0] sm:$0xff]
        %v934 = vld [vmem:[%s654 + $0x2d8] sm:$0xff]
        %v935 = vld [vmem:[%s654 + $0x2e0] sm:$0xff]
        %v936 = vld [vmem:[%s654 + $0x2e8] sm:$0xff]
        %v937 = vld [vmem:[%s654 + $0x2f0] sm:$0xff]
        %v938 = vld [vmem:[%s654 + $0x2f8] sm:$0xff]
        %v939 = vld [vmem:[%s785] sm:$0x3f]
        %v941 = vlaneseq
        %v942 = vshrl.u32 %v941, 7
        %v943 = vsub.s32 0, %v942
        %v944 = vrot.slane %v939, %v943
        %v945 = vlaneseq
        %v946 = vshrl.u32 %v945, 7
        %v947 = vsub.s32 1, %v946
        %v948 = vrot.slane %v939, %v947
        %v949 = vlaneseq
        %v950 = vshrl.u32 %v949, 7
        %v951 = vsub.s32 2, %v950
        %v952 = vrot.slane %v939, %v951
        %v953 = vlaneseq
        %v954 = vshrl.u32 %v953, 7
        %v955 = vsub.s32 3, %v954
        %v956 = vrot.slane %v939, %v955
        %v957 = vlaneseq
        %v958 = vshrl.u32 %v957, 7
        %v959 = vsub.s32 4, %v958
        %v960 = vrot.slane %v939, %v959
        %v961 = vlaneseq
        %v962 = vshrl.u32 %v961, 7
        %v963 = vsub.s32 5, %v962
        %v964 = vrot.slane %v939, %v963
        %971 = vmatprep.subr.mxu0 %v844
        %972 = vmatpush1.msra.mxu0 %v843
        %973 = vmatprep.subr.mxu0 %v850
        %974 = vmatpush1.msra.mxu0 %v849
        %975 = vmatprep.subr.mxu0 %v856
        %976 = vmatpush1.msra.mxu0 %v855
        %977 = vmatprep.subr.mxu0 %v862
        %978 = vmatpush1.msra.mxu0 %v861
        %979 = vmatprep.subr.mxu0 %v868
        %980 = vmatpush1.msra.mxu0 %v867
        %981 = vmatprep.subr.mxu0 %v874
        %982 = vmatpush1.msra.mxu0 %v873
        %983 = vmatprep.subr.mxu0 %v880
        %984 = vmatpush1.msra.mxu0 %v879
        %985 = vmatprep.subr.mxu0 %v886
        %986 = vmatpush1.msra.mxu0 %v885
        %987 = vmatprep.subr.mxu0 %v892
        %988 = vmatpush1.msra.mxu0 %v891
        %989 = vmatprep.subr.mxu0 %v898
        %990 = vmatpush1.msra.mxu0 %v897
        %991 = vmatprep.subr.mxu0 %v904
        %992 = vmatpush1.msra.mxu0 %v903
        %993 = vmatprep.subr.mxu0 %v910
        %994 = vmatpush1.msra.mxu0 %v909
        %995 = vmatprep.subr.mxu0 %v916
        %996 = vmatpush1.msra.mxu0 %v915
        %997 = vmatprep.subr.mxu0 %v922
        %998 = vmatpush1.msra.mxu0 %v921
        %999 = vmatprep.subr.mxu0 %v928
        %1000 = vmatpush1.msra.mxu0 %v927
        %1001 = vmatprep.subr.mxu0 %v934
        %1002 = vmatpush1.msra.mxu0 %v933
        %1003 = vmatprep.subr.mxu0 0.0
        %1004 = vmatpush1.msra.mxu0 0.0
        %1005 = vmatprep.subr.mxu0 0.0
        %1006 = vmatpush1.msra.mxu0 0.0
        %1007 = vmatprep.subr.mxu0 0.0
        %1008 = vmatpush1.msra.mxu0 0.0
        %1009 = vmatprep.subr.mxu0 0.0
        %1010 = vmatpush1.msra.mxu0 0.0
        %1011 = vmatprep.subr.mxu0 0.0
        %1012 = vmatpush1.msra.mxu0 0.0
        %1013 = vmatprep.subr.mxu0 0.0
        %1014 = vmatpush1.msra.mxu0 0.0
        %1015 = vmatprep.subr.mxu0 0.0
        %1016 = vmatpush1.msra.mxu0 0.0
        %1017 = vmatprep.subr.mxu0 0.0
        %1018 = vmatpush1.msra.mxu0 0.0
        %1019 = vmatprep.subr.mxu0 0.0
        %1020 = vmatpush1.msra.mxu0 0.0
        %1021 = vmatprep.subr.mxu0 0.0
        %1022 = vmatpush1.msra.mxu0 0.0
        %1023 = vmatprep.subr.mxu0 0.0
        %1024 = vmatpush1.msra.mxu0 0.0
        %1025 = vmatprep.subr.mxu0 0.0
        %1026 = vmatpush1.msra.mxu0 0.0
        %1027 = vmatprep.subr.mxu0 0.0
        %1028 = vmatpush1.msra.mxu0 0.0
        %1029 = vmatprep.subr.mxu0 0.0
        %1030 = vmatpush1.msra.mxu0 0.0
        %1031 = vmatprep.subr.mxu0 0.0
        %1032 = vmatpush1.msra.mxu0 0.0
        %1033 = vmatprep.subr.mxu0 0.0
        %1034 = vmatpush1.msra.mxu0 0.0
        %1035 = vmatprep.mubr.f32.mxu0 0.0
        %1036 = vmatmul.mubr.f32.gmra.mrb[0].mxu0 %v842
        %v1037 = vpop.f32.mrb[0].mxu0
        %v1038 = vadd.f32 %v944, %v1037
        %v1039 = vpop.f32.mrb[0].mxu0
        %v1040 = vadd.f32 %v948, %v1039
        %1041 = vdwg.mxu0
        %1042 = vmatprep.subr.mxu0 %v846
        %1043 = vmatpush1.msra.mxu0 %v845
        %1044 = vmatprep.subr.mxu0 %v852
        %1045 = vmatpush1.msra.mxu0 %v851
        %1046 = vmatprep.subr.mxu0 %v858
        %1047 = vmatpush1.msra.mxu0 %v857
        %1048 = vmatprep.subr.mxu0 %v864
        %1049 = vmatpush1.msra.mxu0 %v863
        %1050 = vmatprep.subr.mxu0 %v870
        %1051 = vmatpush1.msra.mxu0 %v869
        %1052 = vmatprep.subr.mxu0 %v876
        %1053 = vmatpush1.msra.mxu0 %v875
        %1054 = vmatprep.subr.mxu0 %v882
        %1055 = vmatpush1.msra.mxu0 %v881
        %1056 = vmatprep.subr.mxu0 %v888
        %1057 = vmatpush1.msra.mxu0 %v887
        %1058 = vmatprep.subr.mxu0 %v894
        %1059 = vmatpush1.msra.mxu0 %v893
        %1060 = vmatprep.subr.mxu0 %v900
        %1061 = vmatpush1.msra.mxu0 %v899
        %1062 = vmatprep.subr.mxu0 %v906
        %1063 = vmatpush1.msra.mxu0 %v905
        %1064 = vmatprep.subr.mxu0 %v912
        %1065 = vmatpush1.msra.mxu0 %v911
        %1066 = vmatprep.subr.mxu0 %v918
        %1067 = vmatpush1.msra.mxu0 %v917
        %1068 = vmatprep.subr.mxu0 %v924
        %1069 = vmatpush1.msra.mxu0 %v923
        %1070 = vmatprep.subr.mxu0 %v930
        %1071 = vmatpush1.msra.mxu0 %v929
        %1072 = vmatprep.subr.mxu0 %v936
        %1073 = vmatpush1.msra.mxu0 %v935
        %1074 = vmatprep.subr.mxu0 0.0
        %1075 = vmatpush1.msra.mxu0 0.0
        %1076 = vmatprep.subr.mxu0 0.0
        %1077 = vmatpush1.msra.mxu0 0.0
        %1078 = vmatprep.subr.mxu0 0.0
        %1079 = vmatpush1.msra.mxu0 0.0
        %1080 = vmatprep.subr.mxu0 0.0
        %1081 = vmatpush1.msra.mxu0 0.0
        %1082 = vmatprep.subr.mxu0 0.0
        %1083 = vmatpush1.msra.mxu0 0.0
        %1084 = vmatprep.subr.mxu0 0.0
        %1085 = vmatpush1.msra.mxu0 0.0
        %1086 = vmatprep.subr.mxu0 0.0
        %1087 = vmatpush1.msra.mxu0 0.0
        %1088 = vmatprep.subr.mxu0 0.0
        %1089 = vmatpush1.msra.mxu0 0.0
        %1090 = vmatprep.subr.mxu0 0.0
        %1091 = vmatpush1.msra.mxu0 0.0
        %1092 = vmatprep.subr.mxu0 0.0
        %1093 = vmatpush1.msra.mxu0 0.0
        %1094 = vmatprep.subr.mxu0 0.0
        %1095 = vmatpush1.msra.mxu0 0.0
        %1096 = vmatprep.subr.mxu0 0.0
        %1097 = vmatpush1.msra.mxu0 0.0
        %1098 = vmatprep.subr.mxu0 0.0
        %1099 = vmatpush1.msra.mxu0 0.0
        %1100 = vmatprep.subr.mxu0 0.0
        %1101 = vmatpush1.msra.mxu0 0.0
        %1102 = vmatprep.subr.mxu0 0.0
        %1103 = vmatpush1.msra.mxu0 0.0
        %1104 = vmatprep.subr.mxu0 0.0
        %1105 = vmatpush1.msra.mxu0 0.0
        %1106 = vmatprep.mubr.f32.mxu0 0.0
        %1107 = vmatmul.mubr.f32.gmra.mrb[0].mxu0 %v842
        %v1108 = vpop.f32.mrb[0].mxu0
        %v1109 = vadd.f32 %v952, %v1108
        %v1110 = vpop.f32.mrb[0].mxu0
        %v1111 = vadd.f32 %v956, %v1110
        %1112 = vdwg.mxu0
        %1113 = vmatprep.subr.mxu0 %v848
        %1114 = vmatpush1.msra.mxu0 %v847
        %1115 = vmatprep.subr.mxu0 %v854
        %1116 = vmatpush1.msra.mxu0 %v853
        %1117 = vmatprep.subr.mxu0 %v860
        %1118 = vmatpush1.msra.mxu0 %v859
        %1119 = vmatprep.subr.mxu0 %v866
        %1120 = vmatpush1.msra.mxu0 %v865
        %1121 = vmatprep.subr.mxu0 %v872
        %1122 = vmatpush1.msra.mxu0 %v871
        %1123 = vmatprep.subr.mxu0 %v878
        %1124 = vmatpush1.msra.mxu0 %v877
        %1125 = vmatprep.subr.mxu0 %v884
        %1126 = vmatpush1.msra.mxu0 %v883
        %1127 = vmatprep.subr.mxu0 %v890
        %1128 = vmatpush1.msra.mxu0 %v889
        %1129 = vmatprep.subr.mxu0 %v896
        %1130 = vmatpush1.msra.mxu0 %v895
        %1131 = vmatprep.subr.mxu0 %v902
        %1132 = vmatpush1.msra.mxu0 %v901
        %1133 = vmatprep.subr.mxu0 %v908
        %1134 = vmatpush1.msra.mxu0 %v907
        %1135 = vmatprep.subr.mxu0 %v914
        %1136 = vmatpush1.msra.mxu0 %v913
        %1137 = vmatprep.subr.mxu0 %v920
        %1138 = vmatpush1.msra.mxu0 %v919
        %1139 = vmatprep.subr.mxu0 %v926
        %1140 = vmatpush1.msra.mxu0 %v925
        %1141 = vmatprep.subr.mxu0 %v932
        %1142 = vmatpush1.msra.mxu0 %v931
        %1143 = vmatprep.subr.mxu0 %v938
        %1144 = vmatpush1.msra.mxu0 %v937
        %1145 = vmatprep.subr.mxu0 0.0
        %1146 = vmatpush1.msra.mxu0 0.0
        %1147 = vmatprep.subr.mxu0 0.0
        %1148 = vmatpush1.msra.mxu0 0.0
        %1149 = vmatprep.subr.mxu0 0.0
        %1150 = vmatpush1.msra.mxu0 0.0
        %1151 = vmatprep.subr.mxu0 0.0
        %1152 = vmatpush1.msra.mxu0 0.0
        %1153 = vmatprep.subr.mxu0 0.0
        %1154 = vmatpush1.msra.mxu0 0.0
        %1155 = vmatprep.subr.mxu0 0.0
        %1156 = vmatpush1.msra.mxu0 0.0
        %1157 = vmatprep.subr.mxu0 0.0
        %1158 = vmatpush1.msra.mxu0 0.0
        %1159 = vmatprep.subr.mxu0 0.0
        %1160 = vmatpush1.msra.mxu0 0.0
        %1161 = vmatprep.subr.mxu0 0.0
        %1162 = vmatpush1.msra.mxu0 0.0
        %1163 = vmatprep.subr.mxu0 0.0
        %1164 = vmatpush1.msra.mxu0 0.0
        %1165 = vmatprep.subr.mxu0 0.0
        %1166 = vmatpush1.msra.mxu0 0.0
        %1167 = vmatprep.subr.mxu0 0.0
        %1168 = vmatpush1.msra.mxu0 0.0
        %1169 = vmatprep.subr.mxu0 0.0
        %1170 = vmatpush1.msra.mxu0 0.0
        %1171 = vmatprep.subr.mxu0 0.0
        %1172 = vmatpush1.msra.mxu0 0.0
        %1173 = vmatprep.subr.mxu0 0.0
        %1174 = vmatpush1.msra.mxu0 0.0
        %1175 = vmatprep.subr.mxu0 0.0
        %1176 = vmatpush1.msra.mxu0 0.0
        %1177 = vmatprep.mubr.f32.mxu0 0.0
        %1178 = vmatmul.mubr.f32.gmra.mrb[0].mxu0 %v842
        %v1179 = vpop.f32.mrb[0].mxu0
        %v1180 = vadd.f32 %v960, %v1179
        %v1181 = vpop.f32.mrb[0].mxu0
        %v1182 = vadd.f32 %v964, %v1181
        %1183 = vdwg.mxu0
        %v1184 = vld [vmem:[%s663] sm:$0xff]
        %v1185 = vld [vmem:[%s663 + $0x8] sm:$0xff]
        %v1186 = vld [vmem:[%s663 + $0x10] sm:$0xff]
        %v1187 = vld [vmem:[%s663 + $0x18] sm:$0xff]
        %v1188 = vld [vmem:[%s663 + $0x20] sm:$0xff]
        %v1189 = vld [vmem:[%s663 + $0x28] sm:$0xff]
        %v1190 = vld [vmem:[%s663 + $0x30] sm:$0xff]
        %v1191 = vld [vmem:[%s663 + $0x38] sm:$0xff]
        %v1192 = vld [vmem:[%s663 + $0x40] sm:$0xff]
        %v1193 = vld [vmem:[%s663 + $0x48] sm:$0xff]
        %v1194 = vld [vmem:[%s663 + $0x50] sm:$0xff]
        %v1195 = vld [vmem:[%s663 + $0x58] sm:$0xff]
        %v1196 = vld [vmem:[%s663 + $0x60] sm:$0xff]
        %v1197 = vld [vmem:[%s663 + $0x68] sm:$0xff]
        %v1198 = vld [vmem:[%s663 + $0x70] sm:$0xff]
        %v1199 = vld [vmem:[%s663 + $0x78] sm:$0xff]
        %v1200 = vld [vmem:[%s663 + $0x80] sm:$0xff]
        %v1201 = vld [vmem:[%s663 + $0x88] sm:$0xff]
        %v1202 = vld [vmem:[%s663 + $0x90] sm:$0xff]
        %v1203 = vld [vmem:[%s663 + $0x98] sm:$0xff]
        %v1204 = vld [vmem:[%s663 + $0xa0] sm:$0xff]
        %v1205 = vld [vmem:[%s663 + $0xa8] sm:$0xff]
        %v1206 = vld [vmem:[%s663 + $0xb0] sm:$0xff]
        %v1207 = vld [vmem:[%s663 + $0xb8] sm:$0xff]
        %v1208 = vld [vmem:[%s663 + $0xc0] sm:$0xff]
        %v1209 = vld [vmem:[%s663 + $0xc8] sm:$0xff]
        %v1210 = vld [vmem:[%s663 + $0xd0] sm:$0xff]
        %v1211 = vld [vmem:[%s663 + $0xd8] sm:$0xff]
        %v1212 = vld [vmem:[%s663 + $0xe0] sm:$0xff]
        %v1213 = vld [vmem:[%s663 + $0xe8] sm:$0xff]
        %v1214 = vld [vmem:[%s663 + $0xf0] sm:$0xff]
        %v1215 = vld [vmem:[%s663 + $0xf8] sm:$0xff]
        %1216 = vmatprep.subr.mxu0 0.0
        %1217 = vmatpush1.xpose.msra.mxu0 %v1109
        %1218 = vmatprep.subr.mxu0 0.0
        %1219 = vmatpush1.xpose.msra.mxu0 0.0
        %1220 = vmatprep.subr.mxu0 0.0
        %1221 = vmatpush1.xpose.msra.mxu0 0.0
        %1222 = vmatprep.subr.mxu0 0.0
        %1223 = vmatpush1.xpose.msra.mxu0 0.0
        %1224 = vmatprep.subr.mxu0 0.0
        %1225 = vmatpush1.xpose.msra.mxu0 0.0
        %1226 = vmatprep.subr.mxu0 0.0
        %1227 = vmatpush1.xpose.msra.mxu0 0.0
        %1228 = vmatprep.subr.mxu0 0.0
        %1229 = vmatpush1.xpose.msra.mxu0 0.0
        %1230 = vmatprep.subr.mxu0 0.0
        %1231 = vmatpush1.xpose.msra.mxu0 0.0
        %1232 = vmatprep.subr.mxu0 0.0
        %1233 = vmatpush1.xpose.msra.mxu0 0.0
        %1234 = vmatprep.subr.mxu0 0.0
        %1235 = vmatpush1.xpose.msra.mxu0 0.0
        %1236 = vmatprep.subr.mxu0 0.0
        %1237 = vmatpush1.xpose.msra.mxu0 0.0
        %1238 = vmatprep.subr.mxu0 0.0
        %1239 = vmatpush1.xpose.msra.mxu0 0.0
        %1240 = vmatprep.subr.mxu0 0.0
        %1241 = vmatpush1.xpose.msra.mxu0 0.0
        %1242 = vmatprep.subr.mxu0 0.0
        %1243 = vmatpush1.xpose.msra.mxu0 0.0
        %1244 = vmatprep.subr.mxu0 0.0
        %1245 = vmatpush1.xpose.msra.mxu0 0.0
        %1246 = vmatprep.subr.mxu0 0.0
        %1247 = vmatpush1.xpose.msra.mxu0 0.0
        %1248 = vmatprep.subr.mxu0 0.0
        %1249 = vmatpush1.xpose.msra.mxu0 0.0
        %1250 = vmatprep.subr.mxu0 0.0
        %1251 = vmatpush1.xpose.msra.mxu0 0.0
        %1252 = vmatprep.subr.mxu0 0.0
        %1253 = vmatpush1.xpose.msra.mxu0 0.0
        %1254 = vmatprep.subr.mxu0 0.0
        %1255 = vmatpush1.xpose.msra.mxu0 0.0
        %1256 = vmatprep.subr.mxu0 0.0
        %1257 = vmatpush1.xpose.msra.mxu0 0.0
        %1258 = vmatprep.subr.mxu0 0.0
        %1259 = vmatpush1.xpose.msra.mxu0 0.0
        %1260 = vmatprep.subr.mxu0 0.0
        %1261 = vmatpush1.xpose.msra.mxu0 0.0
        %1262 = vmatprep.subr.mxu0 0.0
        %1263 = vmatpush1.xpose.msra.mxu0 0.0
        %1264 = vmatprep.subr.mxu0 0.0
        %1265 = vmatpush1.xpose.msra.mxu0 0.0
        %1266 = vmatprep.subr.mxu0 0.0
        %1267 = vmatpush1.xpose.msra.mxu0 0.0
        %1268 = vmatprep.subr.mxu0 0.0
        %1269 = vmatpush1.xpose.msra.mxu0 0.0
        %1270 = vmatprep.subr.mxu0 0.0
        %1271 = vmatpush1.xpose.msra.mxu0 0.0
        %1272 = vmatprep.subr.mxu0 0.0
        %1273 = vmatpush1.xpose.msra.mxu0 0.0
        %1274 = vmatprep.subr.mxu0 0.0
        %1275 = vmatpush1.xpose.msra.mxu0 0.0
        %1276 = vmatprep.subr.mxu0 0.0
        %1277 = vmatpush1.xpose.msra.mxu0 0.0
        %1278 = vmatprep.subr.mxu0 0.0
        %1279 = vmatpush1.xpose.msra.mxu0 0.0
        %1280 = vmatprep.mubr.f32.mxu0 0.0
        %1281 = vmatmul.mubr.f32.gmra.mrb[0].mxu0 %v1038
        %v1282 = vpop.f32.mrb[0].mxu0
        %v1283 = vadd.f32 0.0, %v1282
        %v1284 = vpop.f32.mrb[0].mxu0
        %1285 = vdwg.mxu0
        %v1286 = vsel %vm809, %v1283, -1000000.0
        %vm1287 = vcmask 64512
        %v1288 = vsel %vm1287, %v1286, -inf
        %1289 = vmax.xlane.f32.xlu0 %v1288
        %v1290 = vpop.xlane.xlu0 %1289
        %v1291 = vsub.f32 %v1286, %v1290
        %v1292 = vmul.f32 %v1291, 1.442695
        %v1293 = vpow.pop %v1292
        %v1294 = vsel %vm1287, %v1293, 0.0
        %1295 = vadd.xlane.f32.xlu0 %v1294
        %v1296 = vpop.xlane.xlu0 %1295
        %v1297 = vrcp.pop %v1296
        %v1299 = vsel %vm1287, %v1293, 0
        %1301 = vmatprep.subr.mxu0 0.0
        %1302 = vmatpush1.msra.mxu0 %v1180
        %1303 = vmatprep.subr.mxu0 0.0
        %1304 = vmatpush1.msra.mxu0 0.0
        %1305 = vmatprep.subr.mxu0 0.0
        %1306 = vmatpush1.msra.mxu0 0.0
        %1307 = vmatprep.subr.mxu0 0.0
        %1308 = vmatpush1.msra.mxu0 0.0
        %1309 = vmatprep.subr.mxu0 0.0
        %1310 = vmatpush1.msra.mxu0 0.0
        %1311 = vmatprep.subr.mxu0 0.0
        %1312 = vmatpush1.msra.mxu0 0.0
        %1313 = vmatprep.subr.mxu0 0.0
        %1314 = vmatpush1.msra.mxu0 0.0
        %1315 = vmatprep.subr.mxu0 0.0
        %1316 = vmatpush1.msra.mxu0 0.0
        %1317 = vmatprep.subr.mxu0 0.0
        %1318 = vmatpush1.msra.mxu0 0.0
        %1319 = vmatprep.subr.mxu0 0.0
        %1320 = vmatpush1.msra.mxu0 0.0
        %1321 = vmatprep.subr.mxu0 0.0
        %1322 = vmatpush1.msra.mxu0 0.0
        %1323 = vmatprep.subr.mxu0 0.0
        %1324 = vmatpush1.msra.mxu0 0.0
        %1325 = vmatprep.subr.mxu0 0.0
        %1326 = vmatpush1.msra.mxu0 0.0
        %1327 = vmatprep.subr.mxu0 0.0
        %1328 = vmatpush1.msra.mxu0 0.0
        %1329 = vmatprep.subr.mxu0 0.0
        %1330 = vmatpush1.msra.mxu0 0.0
        %1331 = vmatprep.subr.mxu0 0.0
        %1332 = vmatpush1.msra.mxu0 0.0
        %1333 = vmatprep.subr.mxu0 0.0
        %1334 = vmatpush1.msra.mxu0 0.0
        %1335 = vmatprep.subr.mxu0 0.0
        %1336 = vmatpush1.msra.mxu0 0.0
        %1337 = vmatprep.subr.mxu0 0.0
        %1338 = vmatpush1.msra.mxu0 0.0
        %1339 = vmatprep.subr.mxu0 0.0
        %1340 = vmatpush1.msra.mxu0 0.0
        %1341 = vmatprep.subr.mxu0 0.0
        %1342 = vmatpush1.msra.mxu0 0.0
        %1343 = vmatprep.subr.mxu0 0.0
        %1344 = vmatpush1.msra.mxu0 0.0
        %1345 = vmatprep.subr.mxu0 0.0
        %1346 = vmatpush1.msra.mxu0 0.0
        %1347 = vmatprep.subr.mxu0 0.0
        %1348 = vmatpush1.msra.mxu0 0.0
        %1349 = vmatprep.subr.mxu0 0.0
        %1350 = vmatpush1.msra.mxu0 0.0
        %1351 = vmatprep.subr.mxu0 0.0
        %1352 = vmatpush1.msra.mxu0 0.0
        %1353 = vmatprep.subr.mxu0 0.0
        %1354 = vmatpush1.msra.mxu0 0.0
        %1355 = vmatprep.subr.mxu0 0.0
        %1356 = vmatpush1.msra.mxu0 0.0
        %1357 = vmatprep.subr.mxu0 0.0
        %1358 = vmatpush1.msra.mxu0 0.0
        %1359 = vmatprep.subr.mxu0 0.0
        %1360 = vmatpush1.msra.mxu0 0.0
        %1361 = vmatprep.subr.mxu0 0.0
        %1362 = vmatpush1.msra.mxu0 0.0
        %1363 = vmatprep.subr.mxu0 0.0
        %1364 = vmatpush1.msra.mxu0 0.0
        %1365 = vmatprep.mubr.f32.mxu0 0.0
        %1366 = vmatmul.mubr.f32.gmra.mrb[0].mxu0 %v1299
        %v1367 = vpop.f32.mrb[0].mxu0
        %v1368 = vadd.f32 0.0, %v1367
        %v1369 = vpop.f32.mrb[0].mxu0
        %1370 = vdwg.mxu0
        %v1371 = vmul.f32 %v1368, %v1297
        %1372 = vmatprep.subr.mxu0 0.0
        %1373 = vmatpush1.xpose.msra.mxu0 %v1111
        %1374 = vmatprep.subr.mxu0 0.0
        %1375 = vmatpush1.xpose.msra.mxu0 0.0
        %1376 = vmatprep.subr.mxu0 0.0
        %1377 = vmatpush1.xpose.msra.mxu0 0.0
        %1378 = vmatprep.subr.mxu0 0.0
        %1379 = vmatpush1.xpose.msra.mxu0 0.0
        %1380 = vmatprep.subr.mxu0 0.0
        %1381 = vmatpush1.xpose.msra.mxu0 0.0
        %1382 = vmatprep.subr.mxu0 0.0
        %1383 = vmatpush1.xpose.msra.mxu0 0.0
        %1384 = vmatprep.subr.mxu0 0.0
        %1385 = vmatpush1.xpose.msra.mxu0 0.0
        %1386 = vmatprep.subr.mxu0 0.0
        %1387 = vmatpush1.xpose.msra.mxu0 0.0
        %1388 = vmatprep.subr.mxu0 0.0
        %1389 = vmatpush1.xpose.msra.mxu0 0.0
        %1390 = vmatprep.subr.mxu0 0.0
        %1391 = vmatpush1.xpose.msra.mxu0 0.0
        %1392 = vmatprep.subr.mxu0 0.0
        %1393 = vmatpush1.xpose.msra.mxu0 0.0
        %1394 = vmatprep.subr.mxu0 0.0
        %1395 = vmatpush1.xpose.msra.mxu0 0.0
        %1396 = vmatprep.subr.mxu0 0.0
        %1397 = vmatpush1.xpose.msra.mxu0 0.0
        %1398 = vmatprep.subr.mxu0 0.0
        %1399 = vmatpush1.xpose.msra.mxu0 0.0
        %1400 = vmatprep.subr.mxu0 0.0
        %1401 = vmatpush1.xpose.msra.mxu0 0.0
        %1402 = vmatprep.subr.mxu0 0.0
        %1403 = vmatpush1.xpose.msra.mxu0 0.0
        %1404 = vmatprep.subr.mxu0 0.0
        %1405 = vmatpush1.xpose.msra.mxu0 0.0
        %1406 = vmatprep.subr.mxu0 0.0
        %1407 = vmatpush1.xpose.msra.mxu0 0.0
        %1408 = vmatprep.subr.mxu0 0.0
        %1409 = vmatpush1.xpose.msra.mxu0 0.0
        %1410 = vmatprep.subr.mxu0 0.0
        %1411 = vmatpush1.xpose.msra.mxu0 0.0
        %1412 = vmatprep.subr.mxu0 0.0
        %1413 = vmatpush1.xpose.msra.mxu0 0.0
        %1414 = vmatprep.subr.mxu0 0.0
        %1415 = vmatpush1.xpose.msra.mxu0 0.0
        %1416 = vmatprep.subr.mxu0 0.0
        %1417 = vmatpush1.xpose.msra.mxu0 0.0
        %1418 = vmatprep.subr.mxu0 0.0
        %1419 = vmatpush1.xpose.msra.mxu0 0.0
        %1420 = vmatprep.subr.mxu0 0.0
        %1421 = vmatpush1.xpose.msra.mxu0 0.0
        %1422 = vmatprep.subr.mxu0 0.0
        %1423 = vmatpush1.xpose.msra.mxu0 0.0
        %1424 = vmatprep.subr.mxu0 0.0
        %1425 = vmatpush1.xpose.msra.mxu0 0.0
        %1426 = vmatprep.subr.mxu0 0.0
        %1427 = vmatpush1.xpose.msra.mxu0 0.0
        %1428 = vmatprep.subr.mxu0 0.0
        %1429 = vmatpush1.xpose.msra.mxu0 0.0
        %1430 = vmatprep.subr.mxu0 0.0
        %1431 = vmatpush1.xpose.msra.mxu0 0.0
        %1432 = vmatprep.subr.mxu0 0.0
        %1433 = vmatpush1.xpose.msra.mxu0 0.0
        %1434 = vmatprep.subr.mxu0 0.0
        %1435 = vmatpush1.xpose.msra.mxu0 0.0
        %1436 = vmatprep.mubr.f32.mxu0 0.0
        %1437 = vmatmul.mubr.f32.gmra.mrb[0].mxu0 %v1040
        %v1438 = vpop.f32.mrb[0].mxu0
        %v1439 = vadd.f32 0.0, %v1438
        %v1440 = vpop.f32.mrb[0].mxu0
        %1441 = vdwg.mxu0
        %v1442 = vsel %vm809, %v1439, -1000000.0
        %v1443 = vsel %vm1287, %v1442, -inf
        %1444 = vmax.xlane.f32.xlu0 %v1443
        %v1445 = vpop.xlane.xlu0 %1444
        %v1446 = vsub.f32 %v1442, %v1445
        %v1447 = vmul.f32 %v1446, 1.442695
        %v1448 = vpow.pop %v1447
        %v1449 = vsel %vm1287, %v1448, 0.0
        %1450 = vadd.xlane.f32.xlu0 %v1449
        %v1451 = vpop.xlane.xlu0 %1450
        %v1452 = vrcp.pop %v1451
        %v1454 = vsel %vm1287, %v1448, 0
        %1456 = vmatprep.subr.mxu0 0.0
        %1457 = vmatpush1.msra.mxu0 %v1182
        %1458 = vmatprep.subr.mxu0 0.0
        %1459 = vmatpush1.msra.mxu0 0.0
        %1460 = vmatprep.subr.mxu0 0.0
        %1461 = vmatpush1.msra.mxu0 0.0
        %1462 = vmatprep.subr.mxu0 0.0
        %1463 = vmatpush1.msra.mxu0 0.0
        %1464 = vmatprep.subr.mxu0 0.0
        %1465 = vmatpush1.msra.mxu0 0.0
        %1466 = vmatprep.subr.mxu0 0.0
        %1467 = vmatpush1.msra.mxu0 0.0
        %1468 = vmatprep.subr.mxu0 0.0
        %1469 = vmatpush1.msra.mxu0 0.0
        %1470 = vmatprep.subr.mxu0 0.0
        %1471 = vmatpush1.msra.mxu0 0.0
        %1472 = vmatprep.subr.mxu0 0.0
        %1473 = vmatpush1.msra.mxu0 0.0
        %1474 = vmatprep.subr.mxu0 0.0
        %1475 = vmatpush1.msra.mxu0 0.0
        %1476 = vmatprep.subr.mxu0 0.0
        %1477 = vmatpush1.msra.mxu0 0.0
        %1478 = vmatprep.subr.mxu0 0.0
        %1479 = vmatpush1.msra.mxu0 0.0
        %1480 = vmatprep.subr.mxu0 0.0
        %1481 = vmatpush1.msra.mxu0 0.0
        %1482 = vmatprep.subr.mxu0 0.0
        %1483 = vmatpush1.msra.mxu0 0.0
        %1484 = vmatprep.subr.mxu0 0.0
        %1485 = vmatpush1.msra.mxu0 0.0
        %1486 = vmatprep.subr.mxu0 0.0
        %1487 = vmatpush1.msra.mxu0 0.0
        %1488 = vmatprep.subr.mxu0 0.0
        %1489 = vmatpush1.msra.mxu0 0.0
        %1490 = vmatprep.subr.mxu0 0.0
        %1491 = vmatpush1.msra.mxu0 0.0
        %1492 = vmatprep.subr.mxu0 0.0
        %1493 = vmatpush1.msra.mxu0 0.0
        %1494 = vmatprep.subr.mxu0 0.0
        %1495 = vmatpush1.msra.mxu0 0.0
        %1496 = vmatprep.subr.mxu0 0.0
        %1497 = vmatpush1.msra.mxu0 0.0
        %1498 = vmatprep.subr.mxu0 0.0
        %1499 = vmatpush1.msra.mxu0 0.0
        %1500 = vmatprep.subr.mxu0 0.0
        %1501 = vmatpush1.msra.mxu0 0.0
        %1502 = vmatprep.subr.mxu0 0.0
        %1503 = vmatpush1.msra.mxu0 0.0
        %1504 = vmatprep.subr.mxu0 0.0
        %1505 = vmatpush1.msra.mxu0 0.0
        %1506 = vmatprep.subr.mxu0 0.0
        %1507 = vmatpush1.msra.mxu0 0.0
        %1508 = vmatprep.subr.mxu0 0.0
        %1509 = vmatpush1.msra.mxu0 0.0
        %1510 = vmatprep.subr.mxu0 0.0
        %1511 = vmatpush1.msra.mxu0 0.0
        %1512 = vmatprep.subr.mxu0 0.0
        %1513 = vmatpush1.msra.mxu0 0.0
        %1514 = vmatprep.subr.mxu0 0.0
        %1515 = vmatpush1.msra.mxu0 0.0
        %1516 = vmatprep.subr.mxu0 0.0
        %1517 = vmatpush1.msra.mxu0 0.0
        %1518 = vmatprep.subr.mxu0 0.0
        %1519 = vmatpush1.msra.mxu0 0.0
        %1520 = vmatprep.mubr.f32.mxu0 0.0
        %1521 = vmatmul.mubr.f32.gmra.mrb[0].mxu0 %v1454
        %v1522 = vpop.f32.mrb[0].mxu0
        %v1523 = vadd.f32 0.0, %v1522
        %v1524 = vpop.f32.mrb[0].mxu0
        %1525 = vdwg.mxu0
        %v1526 = vmul.f32 %v1523, %v1452
        %1527 = vmatprep.subr.mxu0 0.0
        %1528 = vmatpush1.msra.mxu0 %v1200
        %1529 = vmatprep.subr.mxu0 0.0
        %1530 = vmatpush1.msra.mxu0 %v1201
        %1531 = vmatprep.subr.mxu0 0.0
        %1532 = vmatpush1.msra.mxu0 %v1202
        %1533 = vmatprep.subr.mxu0 0.0
        %1534 = vmatpush1.msra.mxu0 %v1203
        %1535 = vmatprep.subr.mxu0 0.0
        %1536 = vmatpush1.msra.mxu0 %v1204
        %1537 = vmatprep.subr.mxu0 0.0
        %1538 = vmatpush1.msra.mxu0 %v1205
        %1539 = vmatprep.subr.mxu0 0.0
        %1540 = vmatpush1.msra.mxu0 %v1206
        %1541 = vmatprep.subr.mxu0 0.0
        %1542 = vmatpush1.msra.mxu0 %v1207
        %1543 = vmatprep.subr.mxu0 0.0
        %1544 = vmatpush1.msra.mxu0 %v1208
        %1545 = vmatprep.subr.mxu0 0.0
        %1546 = vmatpush1.msra.mxu0 %v1209
        %1547 = vmatprep.subr.mxu0 0.0
        %1548 = vmatpush1.msra.mxu0 %v1210
        %1549 = vmatprep.subr.mxu0 0.0
        %1550 = vmatpush1.msra.mxu0 %v1211
        %1551 = vmatprep.subr.mxu0 0.0
        %1552 = vmatpush1.msra.mxu0 %v1212
        %1553 = vmatprep.subr.mxu0 0.0
        %1554 = vmatpush1.msra.mxu0 %v1213
        %1555 = vmatprep.subr.mxu0 0.0
        %1556 = vmatpush1.msra.mxu0 %v1214
        %1557 = vmatprep.subr.mxu0 0.0
        %1558 = vmatpush1.msra.mxu0 %v1215
        %1559 = vmatprep.subr.mxu0 0.0
        %1560 = vmatpush1.msra.mxu0 0.0
        %1561 = vmatprep.subr.mxu0 0.0
        %1562 = vmatpush1.msra.mxu0 0.0
        %1563 = vmatprep.subr.mxu0 0.0
        %1564 = vmatpush1.msra.mxu0 0.0
        %1565 = vmatprep.subr.mxu0 0.0
        %1566 = vmatpush1.msra.mxu0 0.0
        %1567 = vmatprep.subr.mxu0 0.0
        %1568 = vmatpush1.msra.mxu0 0.0
        %1569 = vmatprep.subr.mxu0 0.0
        %1570 = vmatpush1.msra.mxu0 0.0
        %1571 = vmatprep.subr.mxu0 0.0
        %1572 = vmatpush1.msra.mxu0 0.0
        %1573 = vmatprep.subr.mxu0 0.0
        %1574 = vmatpush1.msra.mxu0 0.0
        %1575 = vmatprep.subr.mxu0 0.0
        %1576 = vmatpush1.msra.mxu0 0.0
        %1577 = vmatprep.subr.mxu0 0.0
        %1578 = vmatpush1.msra.mxu0 0.0
        %1579 = vmatprep.subr.mxu0 0.0
        %1580 = vmatpush1.msra.mxu0 0.0
        %1581 = vmatprep.subr.mxu0 0.0
        %1582 = vmatpush1.msra.mxu0 0.0
        %1583 = vmatprep.subr.mxu0 0.0
        %1584 = vmatpush1.msra.mxu0 0.0
        %1585 = vmatprep.subr.mxu0 0.0
        %1586 = vmatpush1.msra.mxu0 0.0
        %1587 = vmatprep.subr.mxu0 0.0
        %1588 = vmatpush1.msra.mxu0 0.0
        %1589 = vmatprep.subr.mxu0 0.0
        %1590 = vmatpush1.msra.mxu0 0.0
        %1591 = vmatprep.mubr.f32.mxu0 0.0
        %1592 = vmatmul.mubr.f32.gmra.mrb[0].mxu0 %v1526
        %v1593 = vpop.f32.mrb[0].mxu0
        %v1594 = vadd.f32 0.0, %v1593
        %v1595 = vpop.f32.mrb[0].mxu0
        %1596 = vdwg.mxu0
        %1597 = vmatprep.subr.mxu0 0.0
        %1598 = vmatpush1.msra.mxu0 %v1184
        %1599 = vmatprep.subr.mxu0 0.0
        %1600 = vmatpush1.msra.mxu0 %v1185
        %1601 = vmatprep.subr.mxu0 0.0
        %1602 = vmatpush1.msra.mxu0 %v1186
        %1603 = vmatprep.subr.mxu0 0.0
        %1604 = vmatpush1.msra.mxu0 %v1187
        %1605 = vmatprep.subr.mxu0 0.0
        %1606 = vmatpush1.msra.mxu0 %v1188
        %1607 = vmatprep.subr.mxu0 0.0
        %1608 = vmatpush1.msra.mxu0 %v1189
        %1609 = vmatprep.subr.mxu0 0.0
        %1610 = vmatpush1.msra.mxu0 %v1190
        %1611 = vmatprep.subr.mxu0 0.0
        %1612 = vmatpush1.msra.mxu0 %v1191
        %1613 = vmatprep.subr.mxu0 0.0
        %1614 = vmatpush1.msra.mxu0 %v1192
        %1615 = vmatprep.subr.mxu0 0.0
        %1616 = vmatpush1.msra.mxu0 %v1193
        %1617 = vmatprep.subr.mxu0 0.0
        %1618 = vmatpush1.msra.mxu0 %v1194
        %1619 = vmatprep.subr.mxu0 0.0
        %1620 = vmatpush1.msra.mxu0 %v1195
        %1621 = vmatprep.subr.mxu0 0.0
        %1622 = vmatpush1.msra.mxu0 %v1196
        %1623 = vmatprep.subr.mxu0 0.0
        %1624 = vmatpush1.msra.mxu0 %v1197
        %1625 = vmatprep.subr.mxu0 0.0
        %1626 = vmatpush1.msra.mxu0 %v1198
        %1627 = vmatprep.subr.mxu0 0.0
        %1628 = vmatpush1.msra.mxu0 %v1199
        %1629 = vmatprep.subr.mxu0 0.0
        %1630 = vmatpush1.msra.mxu0 0.0
        %1631 = vmatprep.subr.mxu0 0.0
        %1632 = vmatpush1.msra.mxu0 0.0
        %1633 = vmatprep.subr.mxu0 0.0
        %1634 = vmatpush1.msra.mxu0 0.0
        %1635 = vmatprep.subr.mxu0 0.0
        %1636 = vmatpush1.msra.mxu0 0.0
        %1637 = vmatprep.subr.mxu0 0.0
        %1638 = vmatpush1.msra.mxu0 0.0
        %1639 = vmatprep.subr.mxu0 0.0
        %1640 = vmatpush1.msra.mxu0 0.0
        %1641 = vmatprep.subr.mxu0 0.0
        %1642 = vmatpush1.msra.mxu0 0.0
        %1643 = vmatprep.subr.mxu0 0.0
        %1644 = vmatpush1.msra.mxu0 0.0
        %1645 = vmatprep.subr.mxu0 0.0
        %1646 = vmatpush1.msra.mxu0 0.0
        %1647 = vmatprep.subr.mxu0 0.0
        %1648 = vmatpush1.msra.mxu0 0.0
        %1649 = vmatprep.subr.mxu0 0.0
        %1650 = vmatpush1.msra.mxu0 0.0
        %1651 = vmatprep.subr.mxu0 0.0
        %1652 = vmatpush1.msra.mxu0 0.0
        %1653 = vmatprep.subr.mxu0 0.0
        %1654 = vmatpush1.msra.mxu0 0.0
        %1655 = vmatprep.subr.mxu0 0.0
        %1656 = vmatpush1.msra.mxu0 0.0
        %1657 = vmatprep.subr.mxu0 0.0
        %1658 = vmatpush1.msra.mxu0 0.0
        %1659 = vmatprep.subr.mxu0 0.0
        %1660 = vmatpush1.msra.mxu0 0.0
        %1661 = vmatprep.mubr.f32.mxu0 0.0
        %1662 = vmatmul.mubr.f32.gmra.mrb[0].mxu0 %v1371
        %v1663 = vpop.f32.mrb[0].mxu0
        %v1664 = vadd.f32 %v1594, %v1663
        %v1665 = vpop.f32.mrb[0].mxu0
        %1666 = vdwg.mxu0
        %v1667 = vld [vmem:[%s788] sm:$0x1]
        %v1669 = vlaneseq
        %v1670 = vshrl.u32 %v1669, 7
        %v1671 = vsub.s32 0, %v1670
        %v1672 = vrot.slane %v1667, %v1671
        %v1674 = vadd.f32 %v1664, %v1672
        %v1675 = vadd.f32 %v1674, %v807
        %v1676 = vld [vmem:[%s791] sm:$0x1]
        %v1677 = vld [vmem:[%s794] sm:$0x1]
        %1678 = vadd.xlane.f32.xlu0 %v1675
        %v1679 = vpop.xlane.xlu0 %1678
        %v1680 = vmul.f32 %v1679, 0.03125
        %v1681 = vsub.f32 %v1675, %v1680
        %v1682 = vmul.f32 %v1681, %v814
        %v1683 = vmul.f32 %v1682, %v1682
        %1684 = vadd.xlane.f32.xlu0 %v1683
        %v1685 = vpop.xlane.xlu0 %1684
        %v1686 = vmul.f32 %v1685, 0.03125
        %v1687 = vadd.f32 %v1686, 1e-05
        %v1688 = vrsqrt.pop %v1687
        %v1689 = vmul.f32 %v1682, %v1688
        %v1691 = vlaneseq
        %v1692 = vshrl.u32 %v1691, 7
        %v1693 = vsub.s32 0, %v1692
        %v1694 = vrot.slane %v1676, %v1693
        %v1696 = vmul.f32 %v1689, %v1694
        %v1698 = vlaneseq
        %v1699 = vshrl.u32 %v1698, 7
        %v1700 = vsub.s32 0, %v1699
        %v1701 = vrot.slane %v1677, %v1700
        %v1703 = vadd.f32 %v1696, %v1701
        %v1704 = vld [vmem:[%s672] sm:$0xff]
        %v1705 = vld [vmem:[%s672 + $0x8] sm:$0xff]
        %v1706 = vld [vmem:[%s672 + $0x10] sm:$0xff]
        %v1707 = vld [vmem:[%s672 + $0x18] sm:$0xff]
        %v1708 = vld [vmem:[%s672 + $0x20] sm:$0xff]
        %v1709 = vld [vmem:[%s672 + $0x28] sm:$0xff]
        %v1710 = vld [vmem:[%s672 + $0x30] sm:$0xff]
        %v1711 = vld [vmem:[%s672 + $0x38] sm:$0xff]
        %v1712 = vld [vmem:[%s672 + $0x40] sm:$0xff]
        %v1713 = vld [vmem:[%s672 + $0x48] sm:$0xff]
        %v1714 = vld [vmem:[%s672 + $0x50] sm:$0xff]
        %v1715 = vld [vmem:[%s672 + $0x58] sm:$0xff]
        %v1716 = vld [vmem:[%s672 + $0x60] sm:$0xff]
        %v1717 = vld [vmem:[%s672 + $0x68] sm:$0xff]
        %v1718 = vld [vmem:[%s672 + $0x70] sm:$0xff]
        %v1719 = vld [vmem:[%s672 + $0x78] sm:$0xff]
        %v1720 = vld [vmem:[%s797] sm:$0x1]
        %v1722 = vlaneseq
        %v1723 = vshrl.u32 %v1722, 7
        %v1724 = vsub.s32 0, %v1723
        %v1725 = vrot.slane %v1720, %v1724
        %1727 = vmatprep.subr.mxu0 0.0
        %1728 = vmatpush1.msra.mxu0 %v1704
        %1729 = vmatprep.subr.mxu0 0.0
        %1730 = vmatpush1.msra.mxu0 %v1705
        %1731 = vmatprep.subr.mxu0 0.0
        %1732 = vmatpush1.msra.mxu0 %v1706
        %1733 = vmatprep.subr.mxu0 0.0
        %1734 = vmatpush1.msra.mxu0 %v1707
        %1735 = vmatprep.subr.mxu0 0.0
        %1736 = vmatpush1.msra.mxu0 %v1708
        %1737 = vmatprep.subr.mxu0 0.0
        %1738 = vmatpush1.msra.mxu0 %v1709
        %1739 = vmatprep.subr.mxu0 0.0
        %1740 = vmatpush1.msra.mxu0 %v1710
        %1741 = vmatprep.subr.mxu0 0.0
        %1742 = vmatpush1.msra.mxu0 %v1711
        %1743 = vmatprep.subr.mxu0 0.0
        %1744 = vmatpush1.msra.mxu0 %v1712
        %1745 = vmatprep.subr.mxu0 0.0
        %1746 = vmatpush1.msra.mxu0 %v1713
        %1747 = vmatprep.subr.mxu0 0.0
        %1748 = vmatpush1.msra.mxu0 %v1714
        %1749 = vmatprep.subr.mxu0 0.0
        %1750 = vmatpush1.msra.mxu0 %v1715
        %1751 = vmatprep.subr.mxu0 0.0
        %1752 = vmatpush1.msra.mxu0 %v1716
        %1753 = vmatprep.subr.mxu0 0.0
        %1754 = vmatpush1.msra.mxu0 %v1717
        %1755 = vmatprep.subr.mxu0 0.0
        %1756 = vmatpush1.msra.mxu0 %v1718
        %1757 = vmatprep.subr.mxu0 0.0
        %1758 = vmatpush1.msra.mxu0 %v1719
        %1759 = vmatprep.subr.mxu0 0.0
        %1760 = vmatpush1.msra.mxu0 0.0
        %1761 = vmatprep.subr.mxu0 0.0
        %1762 = vmatpush1.msra.mxu0 0.0
        %1763 = vmatprep.subr.mxu0 0.0
        %1764 = vmatpush1.msra.mxu0 0.0
        %1765 = vmatprep.subr.mxu0 0.0
        %1766 = vmatpush1.msra.mxu0 0.0
        %1767 = vmatprep.subr.mxu0 0.0
        %1768 = vmatpush1.msra.mxu0 0.0
        %1769 = vmatprep.subr.mxu0 0.0
        %1770 = vmatpush1.msra.mxu0 0.0
        %1771 = vmatprep.subr.mxu0 0.0
        %1772 = vmatpush1.msra.mxu0 0.0
        %1773 = vmatprep.subr.mxu0 0.0
        %1774 = vmatpush1.msra.mxu0 0.0
        %1775 = vmatprep.subr.mxu0 0.0
        %1776 = vmatpush1.msra.mxu0 0.0
        %1777 = vmatprep.subr.mxu0 0.0
        %1778 = vmatpush1.msra.mxu0 0.0
        %1779 = vmatprep.subr.mxu0 0.0
        %1780 = vmatpush1.msra.mxu0 0.0
        %1781 = vmatprep.subr.mxu0 0.0
        %1782 = vmatpush1.msra.mxu0 0.0
        %1783 = vmatprep.subr.mxu0 0.0
        %1784 = vmatpush1.msra.mxu0 0.0
        %1785 = vmatprep.subr.mxu0 0.0
        %1786 = vmatpush1.msra.mxu0 0.0
        %1787 = vmatprep.subr.mxu0 0.0
        %1788 = vmatpush1.msra.mxu0 0.0
        %1789 = vmatprep.subr.mxu0 0.0
        %1790 = vmatpush1.msra.mxu0 0.0
        %1791 = vmatprep.mubr.f32.mxu0 0.0
        %1792 = vmatmul.mubr.f32.gmra.mrb[0].mxu0 %v1703
        %v1793 = vpop.f32.mrb[0].mxu0
        %v1794 = vadd.f32 %v1725, %v1793
        %v1795 = vpop.f32.mrb[0].mxu0
        %1796 = vdwg.mxu0
        %v1797 = vmax.f32 %v1794, 0.0
        %v1798 = vld [vmem:[%s681] sm:$0xff]
        %v1799 = vld [vmem:[%s681 + $0x8] sm:$0xff]
        %v1800 = vld [vmem:[%s681 + $0x10] sm:$0xff]
        %v1801 = vld [vmem:[%s681 + $0x18] sm:$0xff]
        %v1802 = vld [vmem:[%s681 + $0x20] sm:$0xff]
        %v1803 = vld [vmem:[%s681 + $0x28] sm:$0xff]
        %v1804 = vld [vmem:[%s681 + $0x30] sm:$0xff]
        %v1805 = vld [vmem:[%s681 + $0x38] sm:$0xff]
        %v1806 = vld [vmem:[%s681 + $0x40] sm:$0xff]
        %v1807 = vld [vmem:[%s681 + $0x48] sm:$0xff]
        %v1808 = vld [vmem:[%s681 + $0x50] sm:$0xff]
        %v1809 = vld [vmem:[%s681 + $0x58] sm:$0xff]
        %v1810 = vld [vmem:[%s681 + $0x60] sm:$0xff]
        %v1811 = vld [vmem:[%s681 + $0x68] sm:$0xff]
        %v1812 = vld [vmem:[%s681 + $0x70] sm:$0xff]
        %v1813 = vld [vmem:[%s681 + $0x78] sm:$0xff]
        %v1814 = vld [vmem:[%s800] sm:$0x1]
        %v1816 = vlaneseq
        %v1817 = vshrl.u32 %v1816, 7
        %v1818 = vsub.s32 0, %v1817
        %v1819 = vrot.slane %v1814, %v1818
        %1821 = vmatprep.subr.mxu0 0.0
        %1822 = vmatpush1.msra.mxu0 %v1798
        %1823 = vmatprep.subr.mxu0 0.0
        %1824 = vmatpush1.msra.mxu0 %v1799
        %1825 = vmatprep.subr.mxu0 0.0
        %1826 = vmatpush1.msra.mxu0 %v1800
        %1827 = vmatprep.subr.mxu0 0.0
        %1828 = vmatpush1.msra.mxu0 %v1801
        %1829 = vmatprep.subr.mxu0 0.0
        %1830 = vmatpush1.msra.mxu0 %v1802
        %1831 = vmatprep.subr.mxu0 0.0
        %1832 = vmatpush1.msra.mxu0 %v1803
        %1833 = vmatprep.subr.mxu0 0.0
        %1834 = vmatpush1.msra.mxu0 %v1804
        %1835 = vmatprep.subr.mxu0 0.0
        %1836 = vmatpush1.msra.mxu0 %v1805
        %1837 = vmatprep.subr.mxu0 0.0
        %1838 = vmatpush1.msra.mxu0 %v1806
        %1839 = vmatprep.subr.mxu0 0.0
        %1840 = vmatpush1.msra.mxu0 %v1807
        %1841 = vmatprep.subr.mxu0 0.0
        %1842 = vmatpush1.msra.mxu0 %v1808
        %1843 = vmatprep.subr.mxu0 0.0
        %1844 = vmatpush1.msra.mxu0 %v1809
        %1845 = vmatprep.subr.mxu0 0.0
        %1846 = vmatpush1.msra.mxu0 %v1810
        %1847 = vmatprep.subr.mxu0 0.0
        %1848 = vmatpush1.msra.mxu0 %v1811
        %1849 = vmatprep.subr.mxu0 0.0
        %1850 = vmatpush1.msra.mxu0 %v1812
        %1851 = vmatprep.subr.mxu0 0.0
        %1852 = vmatpush1.msra.mxu0 %v1813
        %1853 = vmatprep.subr.mxu0 0.0
        %1854 = vmatpush1.msra.mxu0 0.0
        %1855 = vmatprep.subr.mxu0 0.0
        %1856 = vmatpush1.msra.mxu0 0.0
        %1857 = vmatprep.subr.mxu0 0.0
        %1858 = vmatpush1.msra.mxu0 0.0
        %1859 = vmatprep.subr.mxu0 0.0
        %1860 = vmatpush1.msra.mxu0 0.0
        %1861 = vmatprep.subr.mxu0 0.0
        %1862 = vmatpush1.msra.mxu0 0.0
        %1863 = vmatprep.subr.mxu0 0.0
        %1864 = vmatpush1.msra.mxu0 0.0
        %1865 = vmatprep.subr.mxu0 0.0
        %1866 = vmatpush1.msra.mxu0 0.0
        %1867 = vmatprep.subr.mxu0 0.0
        %1868 = vmatpush1.msra.mxu0 0.0
        %1869 = vmatprep.subr.mxu0 0.0
        %1870 = vmatpush1.msra.mxu0 0.0
        %1871 = vmatprep.subr.mxu0 0.0
        %1872 = vmatpush1.msra.mxu0 0.0
        %1873 = vmatprep.subr.mxu0 0.0
        %1874 = vmatpush1.msra.mxu0 0.0
        %1875 = vmatprep.subr.mxu0 0.0
        %1876 = vmatpush1.msra.mxu0 0.0
        %1877 = vmatprep.subr.mxu0 0.0
        %1878 = vmatpush1.msra.mxu0 0.0
        %1879 = vmatprep.subr.mxu0 0.0
        %1880 = vmatpush1.msra.mxu0 0.0
        %1881 = vmatprep.subr.mxu0 0.0
        %1882 = vmatpush1.msra.mxu0 0.0
        %1883 = vmatprep.subr.mxu0 0.0
        %1884 = vmatpush1.msra.mxu0 0.0
        %1885 = vmatprep.mubr.f32.mxu0 0.0
        %1886 = vmatmul.mubr.f32.gmra.mrb[0].mxu0 %v1797
        %v1887 = vpop.f32.mrb[0].mxu0
        %v1888 = vadd.f32 %v1819, %v1887
        %v1889 = vpop.f32.mrb[0].mxu0
        %1890 = vdwg.mxu0
        %v1891 = vadd.f32 %v1888, %v1675
        %1892 = vst [vmem:[%s775] sm:$0xff] %v1891
        %s1893 = sand.u32 %s424, 1
        %s1894 = scalar_lea.sflag [#allocation4], %s1893
        %s1895 = sand.u32 %s424, 1
        %s1896 = smul.addr %s1895, 8
        %s1897 = scalar_lea.vmem [#allocation13], %s1896
        // Predicated region
        $region105: #{tpu_custom_call.1} parent=75 // pred_check
          %p1898 = pneg %p434
        $region106: #{tpu_custom_call.1} parent=75 // pred_check_branch
          %1900 = sbr.rel (%p1898) target = $region108
        $region107: #{tpu_custom_call.1} parent=75 // pred_region
          %s1902 = ssub.s32 128, 128
          %1903 = vsyncadd %s1894, %s1902
          %s1904 = smul.addr %s44, 128
          %s1905 = scalar_lea.hbm %s14, %s1904
          %s1907 = sshll.u32 %s1897, 4
          %s1908 = int_to_ptr.vmem [resolvable:$true] %s1907
          %1910 = dma.vmem_to_hbm [thread:$0]  %s1908, 128, %s1905, %s1894
        $region108: #{tpu_custom_call.1} parent=75 // pred_fallthru
          _
      $region76: #{tpu_custom_call.1} parent=5 // pred_fallthru
        _
      %p1911 = scmp.le.s32.totalorder 2, %s35
      // Predicated region
      $region109: #{tpu_custom_call.1} parent=5 // pred_check
        %p1912 = pneg %p1911
      $region110: #{tpu_custom_call.1} parent=5 // pred_check_branch
        %1914 = sbr.rel (%p1912) target = $region112
      $region111: #{tpu_custom_call.1} parent=5 // pred_region
        %s1915 = ssub.s32 %s35, 2
        // Predicated region
        $region113: #{tpu_custom_call.1} parent=111 // pred_check
          %p1916 = pneg %p440
        $region114: #{tpu_custom_call.1} parent=111 // pred_check_branch
          %1918 = sbr.rel (%p1916) target = $region116
        $region115: #{tpu_custom_call.1} parent=111 // pred_region
          %s1919 = sand.u32 %s425, 1
          %s1920 = scalar_lea.sflag [#allocation4], %s1919
          %s1921 = sand.u32 %s425, 1
          %s1922 = smul.addr %s1921, 8
          %s1923 = scalar_lea.vmem [#allocation13], %s1922
          %1924 = dma.done %s1920, 128
        $region116: #{tpu_custom_call.1} parent=111 // pred_fallthru
          _
      $region112: #{tpu_custom_call.1} parent=5 // pred_fallthru
        _
    $region6: #{tpu_custom_call.1} parent=1 // loop_footer
      %s39 = sadd.s32 1, %s35
    $region7: #{tpu_custom_call.1} parent=1 // loop_footer_branch
      %34 = sbr.rel target = $region3
    $region8: #{tpu_custom_call.1} parent=1 // loop_exit
      _
    %1925 = vsyncpa [#allocation3], 1
    %s1926 = scalar_lea.sflag [#allocation3], 1
    %1927 = vsyncpa %s1926, 1
    %1928 = vsyncpa [#allocation6], 1
    %s1929 = scalar_lea.sflag [#allocation6], 1
    %1930 = vsyncpa %s1929, 1
    %1931 = vsyncpa [#allocation9], 1
    %s1932 = scalar_lea.sflag [#allocation9], 1
    %1933 = vsyncpa %s1932, 1
    %1934 = vsyncpa [#allocation12], 1
    %s1935 = scalar_lea.sflag [#allocation12], 1
    %1936 = vsyncpa %s1935, 1
    %1937 = vsyncpa [#allocation4], 1
    %s1938 = scalar_lea.sflag [#allocation4], 1
    %1939 = vsyncpa %s1938, 1

</llo_original>
